<compile_context>
chip_gen: v7x
topology: tpu7x:2x2x1
jax: 0.10.0
libtpu: 0.0.40
codegen_flags: <defaults>
</compile_context>

<pallas_src>
import numpy as np

import jax
import jax.numpy as jnp
from jax.experimental import pallas as pl
from jax.experimental.pallas import tpu as pltpu

# ---------------- model hyper-params (small, consistent with the module) ----
BATCH = 2
IMG_C, IMG_H, IMG_W = 3, 16, 16
NUM_FTRS = 32                 # num_ftrs//4 = 8, num_ftrs//2 = 16
FEATURE_SIZE = 16
COUT = NUM_FTRS // 2          # conv-block output channels = classifier input
CLASSES = 10
BN_EPS = 1e-5

CP = 128                      # one lane-dense vreg row
ROWS = BATCH * 8              # padded rows per block: 8 image rows per batch

BLOCK_HW = ((8, 8), (4, 4), (4, 4))                 # spatial size per conv block
BLOCK_CIN = (NUM_FTRS // 4, NUM_FTRS // 2, NUM_FTRS)

_VMEM = pl.BlockSpec(memory_space=pltpu.MemorySpace.VMEM)
_HI = jax.lax.Precision.HIGHEST


# ---------------- fused Pallas kernel ----------------------------------------
def _conv_block(x, w1, b1, s_m, s_p, w2_m, w2_0, w2_p, b2, w, h_valid):
    """1x1conv+BN+ReLU -> 3x3conv(pad=1)+BN+ReLU -> AdaptiveMaxPool2d(1).

    x    : (ROWS, W*Cin)   rows ordered (b, y) with 8 rows reserved per batch,
                           lanes ordered x-major / channel-minor.
    w1   : (W*Cin, CP)     block-diagonal, BN-folded 1x1 weights.
    b1   : (1, CP)         folded BN shift (tiled per x group, zero padded).
    s_m/s_p : (ROWS, ROWS) 0/1 y-shift matrices for dy=-1 / dy=+1 (y boundary
                           + batch boundary baked in host-side).
    w2_* : (CP, CP)        block-banded, BN-folded 3x3 weights per dy tap
                           (x boundary baked into the band).
    b2   : (1, CP)         folded BN shift (tiled, zero padded).
    Returns (BATCH, COUT) max-pooled features.
    """
    f32 = jnp.float32
    # 1x1 conv (+ folded BN) + ReLU; padded lanes stay exactly 0.
    a1 = jnp.maximum(jnp.dot(x, w1, preferred_element_type=f32) + b1, 0.0)

    # 3x3 conv: x-taps in the banded weight, y-taps via the tiny shift matmuls.
    z = jnp.dot(a1, w2_0, preferred_element_type=f32)
    z = z + jnp.dot(jnp.dot(s_m, a1, preferred_element_type=f32), w2_m,
                    preferred_element_type=f32)
    z = z + jnp.dot(jnp.dot(s_p, a1, preferred_element_type=f32), w2_p,
                    preferred_element_type=f32)
    y = jnp.maximum(z + b2, 0.0)                       # (ROWS, CP)

    if h_valid < 8:  # zero the unused padded rows before the max (4x4 blocks)
        rows = jax.lax.broadcasted_iota(jnp.int32, y.shape, 0)
        y = jnp.where(rows % 8 < h_valid, y, 0.0)

    # AdaptiveMaxPool2d(1): max over the 8 rows of each batch, then over the
    # W x-groups packed along the lanes.
    ym = jnp.max(y.reshape(BATCH, 8, CP), axis=1)      # (BATCH, CP)
    p = ym[:, :COUT]
    for g in range(1, w):
        p = jnp.maximum(p, ym[:, g * COUT:(g + 1) * COUT])
    return p                                           # (BATCH, COUT)


def _fused_head_kernel(x1_ref, x2_ref, x3_ref, w1p_ref, w2p_ref, sp_ref,
                       bias_ref, ap_ref, w2b_ref, ys_ref, fs_ref):
    f32 = jnp.float32

    p1 = _conv_block(x1_ref[...], w1p_ref[0, :64, :], bias_ref[0:1, :],
                     sp_ref[0, :, :], sp_ref[1, :, :],
                     w2p_ref[0, 0, :, :], w2p_ref[0, 1, :, :],
                     w2p_ref[0, 2, :, :],
                     bias_ref[3:4, :], w=8, h_valid=8)
    p2 = _conv_block(x2_ref[...], w1p_ref[1, :64, :], bias_ref[1:2, :],
                     sp_ref[2, :, :], sp_ref[3, :, :],
                     w2p_ref[1, 0, :, :], w2p_ref[1, 1, :, :],
                     w2p_ref[1, 2, :, :],
                     bias_ref[4:5, :], w=4, h_valid=4)
    p3 = _conv_block(x3_ref[...], w1p_ref[2, :, :], bias_ref[2:3, :],
                     sp_ref[2, :, :], sp_ref[3, :, :],
                     w2p_ref[2, 0, :, :], w2p_ref[2, 1, :, :],
                     w2p_ref[2, 2, :, :],
                     bias_ref[5:6, :], w=4, h_valid=4)

    # 4 classifiers fused into two block-structured matmuls (BN/bias folded,
    # Dropout = identity in eval mode).  Hidden slots packed into 64 lanes
    # (padded to 128), class outputs packed into 4 x 32-lane blocks.
    h = (jnp.dot(p1, ap_ref[0, :, :], preferred_element_type=f32)
         + jnp.dot(p2, ap_ref[1, :, :], preferred_element_type=f32)
         + jnp.dot(p3, ap_ref[2, :, :], preferred_element_type=f32)
         + bias_ref[6:7, :])
    # ELU(alpha=1); exp argument clamped to <= 0 so the positive branch is
    # inf-free.
    e = jnp.maximum(h, 0.0) + jnp.exp(jnp.minimum(h, 0.0)) - 1.0
    ys_ref[...] = (jnp.dot(e, w2b_ref[...], preferred_element_type=f32)
                   + bias_ref[7:8, :])

    fs_ref[0, :, :] = p1
    fs_ref[1, :, :] = p2
    fs_ref[2, :, :] = p3


def _fused_head(x1, x2, x3, ops):
    # TODO(synk): for batch >> 2 add a batch grid axis with
    # dimension_semantics=("parallel",) so the second v7x TensorCore is used;
    # at B=2 a single grid-less call is the right shape.
    operands = (x1, x2, x3, ops["w1pack"], ops["w2pack"], ops["spack"],
                ops["biaspack"], ops["apack"], ops["w2big"])
    return pl.pallas_call(
        _fused_head_kernel,
        out_shape=(jax.ShapeDtypeStruct((BATCH, CP), jnp.float32),
                   jax.ShapeDtypeStruct((3, BATCH, COUT), jnp.float32)),
        in_specs=[_VMEM] * len(operands),
        out_specs=(_VMEM, _VMEM),
    )(*operands)


# ---------------- parameter handling (host-side packing) ---------------------
def _bn_fold(bn):
    s = bn["gamma"] / jnp.sqrt(bn["var"] + BN_EPS)
    return s, bn["beta"] - bn["mean"] * s


def _bn_fold_np(bn):
    g, b = np.asarray(bn["gamma"]), np.asarray(bn["beta"])
    m, v = np.asarray(bn["mean"]), np.asarray(bn["var"])
    s = g / np.sqrt(v + BN_EPS)
    return s, b - m * s


def init_raw_params(key):
    """PyTorch-layout parameters: conv (O,I[,kh,kw]), linear (O,I), BN stats."""
    keys = iter(jax.random.split(key, 128))

    def nrm(shape, scale=0.1):
        return jax.random.normal(next(keys), shape, jnp.float32) * scale

    def bn(c):
        return dict(gamma=1.0 + nrm((c,)), beta=nrm((c,)),
                    mean=nrm((c,)), var=1.0 + jnp.abs(nrm((c,))))

    def conv_block(cin):
        return dict(w1=nrm((FEATURE_SIZE, cin)), bn1=bn(FEATURE_SIZE),
                    w2=nrm((COUT, FEATURE_SIZE, 3, 3)), bn2=bn(COUT))

    def classifier(cin):
        return dict(bn0=bn(cin),
                    w1=nrm((FEATURE_SIZE, cin)), b1=nrm((FEATURE_SIZE,)),
                    bn1=bn(FEATURE_SIZE),
                    w2=nrm((CLASSES, FEATURE_SIZE)), b2=nrm((CLASSES,)))

    return dict(cb1=conv_block(BLOCK_CIN[0]), cb2=conv_block(BLOCK_CIN[1]),
                cb3=conv_block(BLOCK_CIN[2]),
                cls1=classifier(COUT), cls2=classifier(COUT),
                cls3=classifier(COUT), cls_cat=classifier(3 * COUT))


def pack_params(raw):
    """Fold BN, build block-diag 1x1 / block-banded 3x3 weights, y-shift
    matrices and packed classifier weights; consolidate into 6 VMEM slabs."""
    F = FEATURE_SIZE
    w1pack = np.zeros((3, 128, 128), np.float32)
    w2pack = np.zeros((3, 3, 128, 128), np.float32)
    biaspack = np.zeros((8, 128), np.float32)

    for i, name in enumerate(("cb1", "cb2", "cb3")):
        cb = raw[name]
        s1, sh1 = _bn_fold_np(cb["bn1"])
        s2, sh2 = _bn_fold_np(cb["bn2"])
        _, wd = BLOCK_HW[i]
        cin = BLOCK_CIN[i]
        w1f = np.asarray(cb["w1"]).T * s1[None, :]                  # (Cin, F)
        for xg in range(wd):                                        # block-diag
            w1pack[i, xg * cin:(xg + 1) * cin, xg * F:(xg + 1) * F] = w1f
        biaspack[i, :wd * F] = np.tile(sh1, wd)
        w2 = np.asarray(cb["w2"])                                   # (CO,F,3,3)
        for d, dy in enumerate((-1, 0, 1)):                         # banded
            for xo in range(wd):
                for dx in (-1, 0, 1):
                    xi = xo + dx
                    if 0 <= xi < wd:
                        tap = w2[:, :, dy + 1, dx + 1].T * s2[None, :]  # (F,CO)
                        w2pack[i, d, xi * F:(xi + 1) * F,
                               xo * COUT:(xo + 1) * COUT] = tap
        biaspack[3 + i, :wd * COUT] = np.tile(sh2, wd)

    # y-shift matrices (y boundary + batch boundary baked in): rows r = b*8 + y
    spack = np.zeros((4, ROWS, ROWS), np.float32)
    for hi, hval in enumerate((8, 4)):
        for di, dy in enumerate((-1, 1)):
            for b in range(BATCH):
                for y in range(hval):
                    yy = y + dy
                    if 0 <= yy < hval:
                        spack[hi * 2 + di, b * 8 + y, b * 8 + yy] = 1.0

    # classifiers: BN1d -> Linear -> BN1d folded to one affine per classifier.
    def fold_cls(c):
        s0, sh0 = _bn_fold_np(c["bn0"])
        s1, sh1 = _bn_fold_np(c["bn1"])
        w1 = np.asarray(c["w1"])
        a = (s0[:, None] * w1.T) * s1[None, :]                      # (cin, F)
        cvec = (sh0 @ w1.T + np.asarray(c["b1"])) * s1 + sh1        # (F,)
        return a, cvec, np.asarray(c["w2"]).T, np.asarray(c["b2"])

    folded = [fold_cls(raw[n]) for n in ("cls1", "cls2", "cls3", "cls_cat")]
    apack = np.zeros((3, COUT, 128), np.float32)
    w2big = np.zeros((128, 128), np.float32)
    for i in range(3):                          # per-scale classifiers
        a, cvec, _, _ = folded[i]
        apack[i, :, i * F:(i + 1) * F] = a
        biaspack[6, i * F:(i + 1) * F] = cvec
    a_cat, c_cat, _, _ = folded[3]              # concat classifier ([f1|f2|f3])
    for i in range(3):
        apack[i, :, 3 * F:4 * F] = a_cat[i * COUT:(i + 1) * COUT, :]
    biaspack[6, 3 * F:4 * F] = c_cat
    for i in range(4):                          # 4 x 32-lane class blocks
        _, _, w2c, d = folded[i]
        w2big[i * F:(i + 1) * F, i * 32:i * 32 + CLASSES] = w2c
        biaspack[7, i * 32:i * 32 + CLASSES] = d

    return dict(w1pack=jnp.asarray(w1pack), w2pack=jnp.asarray(w2pack),
                spack=jnp.asarray(spack), biaspack=jnp.asarray(biaspack),
                apack=jnp.asarray(apack), w2big=jnp.asarray(w2big))


# ---------------- backbone stub + forward ------------------------------------
def stub_backbone(x, key):
    # TODO(synk): the real backbone is an external pretrained CNN (img_size
    # 448) that is not defined in model.py; replaced by a deterministic
    # avg-pool + fixed channel projection so f1/f2/f3 have the shapes the head
    # expects.  Features are emitted channels-last (B, H, W, C).
    b, c, hh, ww = x.shape

    def pool(a, f):
        return a.reshape(b, c, hh // f, f, ww // f, f).mean(axis=(3, 5))

    k1, k2, k3 = jax.random.split(key, 3)
    p1 = jax.random.normal(k1, (c, BLOCK_CIN[0]), jnp.float32) * 0.5
    p2 = jax.random.normal(k2, (c, BLOCK_CIN[1]), jnp.float32) * 0.5
    p3 = jax.random.normal(k3, (c, BLOCK_CIN[2]), jnp.float32) * 0.5
    f1 = jnp.einsum("bchw,cd->bhwd", pool(x, 2), p1)    # (B, 8, 8,  8)
    f2 = jnp.einsum("bchw,cd->bhwd", pool(x, 4), p2)    # (B, 4, 4, 16)
    f3 = jnp.einsum("bchw,cd->bhwd", pool(x, 4), p3)    # (B, 4, 4, 32)
    return f1, f2, f3


def _to_rows(f):
    """(B, H, W, C) -> (B*8, W*C): one row per image row (8 rows reserved per
    batch element), lanes x-major / channel-minor.  Pure layout plumbing."""
    b, h, w, c = f.shape
    if h < 8:
        f = jnp.pad(f, ((0, 0), (0, 8 - h), (0, 0), (0, 0)))
    return f.reshape(b * 8, w * c)


@jax.jit
def cnn_net_forward(x, ops, backbone_key):
    f1, f2, f3 = stub_backbone(x, backbone_key)
    ys, fs = _fused_head(_to_rows(f1), _to_rows(f2), _to_rows(f3), ops)
    y1, y2, y3, y4 = (ys[:, i * 32:i * 32 + CLASSES] for i in range(4))
    return y1, y2, y3, y4, fs[0], fs[1], fs[2]


# ---------------- pure-JAX reference of the PyTorch forward ------------------
def reference_forward(f1, f2, f3, raw):
    def conv_block_ref(xf, cb):
        b, h, w, _ = xf.shape
        s1, sh1 = _bn_fold(cb["bn1"])
        s2, sh2 = _bn_fold(cb["bn2"])
        a = jnp.maximum(
            jnp.einsum("bhwc,fc->bhwf", xf, cb["w1"], precision=_HI) * s1 + sh1,
            0.0)
        ap = jnp.pad(a, ((0, 0), (1, 1), (1, 1), (0, 0)))
        acc = jnp.zeros((b, h, w, COUT), jnp.float32)
        for ky in range(3):
            for kx in range(3):
                acc = acc + jnp.einsum("bhwc,oc->bhwo",
                                       ap[:, ky:ky + h, kx:kx + w, :],
                                       cb["w2"][:, :, ky, kx], precision=_HI)
        y = jnp.maximum(acc * s2 + sh2, 0.0)
        return jnp.max(y, axis=(1, 2))

    def classifier_ref(f, c):
        s0, sh0 = _bn_fold(c["bn0"])
        s1, sh1 = _bn_fold(c["bn1"])
        v = (jnp.dot(f * s0 + sh0, c["w1"].T, precision=_HI) + c["b1"]) * s1 + sh1
        e = jnp.where(v > 0.0, v, jnp.exp(jnp.minimum(v, 0.0)) - 1.0)
        return jnp.dot(e, c["w2"].T, precision=_HI) + c["b2"]

    g1 = conv_block_ref(f1, raw["cb1"])
    g2 = conv_block_ref(f2, raw["cb2"])
    g3 = conv_block_ref(f3, raw["cb3"])
    y1 = classifier_ref(g1, raw["cls1"])
    y2 = classifier_ref(g2, raw["cls2"])
    y3 = classifier_ref(g3, raw["cls3"])
    y4 = classifier_ref(jnp.concatenate([g1, g2, g3], axis=-1), raw["cls_cat"])
    return y1, y2, y3, y4, g1, g2, g3


# ---------------- main --------------------------------------------------------
if __name__ == "__main__":
    key = jax.random.PRNGKey(0)
    kx, kp, kb = jax.random.split(key, 3)
    x = jax.random.normal(kx, (BATCH, IMG_C, IMG_H, IMG_W), jnp.float32)
    raw = init_raw_params(kp)
    ops = pack_params(raw)

    outs = jax.block_until_ready(cnn_net_forward(x, ops, kb))
    y1, y2, y3, y4, f1, f2, f3 = outs

    assert y1.shape == y2.shape == y3.shape == y4.shape == (BATCH, CLASSES)
    assert f1.shape == f2.shape == f3.shape == (BATCH, COUT)
    assert all(bool(jnp.isfinite(o).all()) for o in outs)

    # numerical check against a pure-JAX reference of the PyTorch forward
    b1, b2, b3 = stub_backbone(x, kb)
    ref = reference_forward(b1, b2, b3, raw)
    for got, want in zip(outs, ref):
        err = float(jnp.max(jnp.abs(got - want)))
        assert err < 2e-3, f"mismatch vs reference: {err}"

    print("KERNEL_OK")
</pallas_src>

<mosaic_0001>
module attributes {stable_mosaic.version = 11 : i64} {
  func.func @_fused_head_kernel(%arg0: memref<16x64xf32, #tpu.memory_space<vmem>>, %arg1: memref<16x64xf32, #tpu.memory_space<vmem>>, %arg2: memref<16x128xf32, #tpu.memory_space<vmem>>, %arg3: memref<3x128x128xf32, #tpu.memory_space<vmem>>, %arg4: memref<3x3x128x128xf32, #tpu.memory_space<vmem>>, %arg5: memref<4x16x16xf32, #tpu.memory_space<vmem>>, %arg6: memref<8x128xf32, #tpu.memory_space<vmem>>, %arg7: memref<3x16x128xf32, #tpu.memory_space<vmem>>, %arg8: memref<128x128xf32, #tpu.memory_space<vmem>>, %arg9: memref<2x128xf32, #tpu.memory_space<vmem>>, %arg10: memref<3x2x16xf32, #tpu.memory_space<vmem>>) attributes {dimension_semantics = [], scalar_prefetch = 0 : i64, scratch_operands = 0 : i64, tpu.core_type = #tpu.core_type<tc>} {
    %c0 = arith.constant 0 : index
    %c0_0 = arith.constant 0 : index
    %0 = vector.load %arg0[%c0, %c0_0] : memref<16x64xf32, #tpu.memory_space<vmem>>, vector<16x64xf32>
    %c0_1 = arith.constant 0 : index
    %c0_2 = arith.constant 0 : index
    %c0_3 = arith.constant 0 : index
    %1 = vector.load %arg3[%c0_1, %c0_2, %c0_3] : memref<3x128x128xf32, #tpu.memory_space<vmem>>, vector<1x64x128xf32>
    %2 = vector.shape_cast %1 : vector<1x64x128xf32> to vector<64x128xf32>
    %c0_4 = arith.constant 0 : index
    %c0_5 = arith.constant 0 : index
    %3 = vector.load %arg6[%c0_4, %c0_5] : memref<8x128xf32, #tpu.memory_space<vmem>>, vector<1x128xf32>
    %c0_6 = arith.constant 0 : index
    %c0_7 = arith.constant 0 : index
    %c0_8 = arith.constant 0 : index
    %4 = vector.load %arg5[%c0_6, %c0_7, %c0_8] : memref<4x16x16xf32, #tpu.memory_space<vmem>>, vector<1x16x16xf32>
    %5 = vector.shape_cast %4 : vector<1x16x16xf32> to vector<16x16xf32>
    %c1 = arith.constant 1 : index
    %c0_9 = arith.constant 0 : index
    %c0_10 = arith.constant 0 : index
    %6 = vector.load %arg5[%c1, %c0_9, %c0_10] : memref<4x16x16xf32, #tpu.memory_space<vmem>>, vector<1x16x16xf32>
    %7 = vector.shape_cast %6 : vector<1x16x16xf32> to vector<16x16xf32>
    %c0_11 = arith.constant 0 : index
    %c0_12 = arith.constant 0 : index
    %c0_13 = arith.constant 0 : index
    %c0_14 = arith.constant 0 : index
    %8 = vector.load %arg4[%c0_11, %c0_12, %c0_13, %c0_14] : memref<3x3x128x128xf32, #tpu.memory_space<vmem>>, vector<1x1x128x128xf32>
    %9 = vector.shape_cast %8 : vector<1x1x128x128xf32> to vector<128x128xf32>
    %c0_15 = arith.constant 0 : index
    %c1_16 = arith.constant 1 : index
    %c0_17 = arith.constant 0 : index
    %c0_18 = arith.constant 0 : index
    %10 = vector.load %arg4[%c0_15, %c1_16, %c0_17, %c0_18] : memref<3x3x128x128xf32, #tpu.memory_space<vmem>>, vector<1x1x128x128xf32>
    %11 = vector.shape_cast %10 : vector<1x1x128x128xf32> to vector<128x128xf32>
    %c0_19 = arith.constant 0 : index
    %c2 = arith.constant 2 : index
    %c0_20 = arith.constant 0 : index
    %c0_21 = arith.constant 0 : index
    %12 = vector.load %arg4[%c0_19, %c2, %c0_20, %c0_21] : memref<3x3x128x128xf32, #tpu.memory_space<vmem>>, vector<1x1x128x128xf32>
    %13 = vector.shape_cast %12 : vector<1x1x128x128xf32> to vector<128x128xf32>
    %c3 = arith.constant 3 : index
    %c0_22 = arith.constant 0 : index
    %14 = vector.load %arg6[%c3, %c0_22] : memref<8x128xf32, #tpu.memory_space<vmem>>, vector<1x128xf32>
    %cst = arith.constant dense<0.000000e+00> : vector<16x128xf32>
    %15 = tpu.matmul %0, %2, %cst {dimension_numbers = #tpu.dot_dimension_numbers<[1], [0], [0], [1], [0, 0, 1, 1], [], []>} : vector<16x64xf32>, vector<64x128xf32>, vector<16x128xf32> -> vector<16x128xf32>
    %16 = vector.broadcast %3 : vector<1x128xf32> to vector<16x128xf32>
    %17 = arith.addf %15, %16 : vector<16x128xf32>
    %cst_23 = arith.constant 0.000000e+00 : f32
    %18 = vector.broadcast %cst_23 : f32 to vector<16x128xf32>
    %19 = arith.maximumf %17, %18 : vector<16x128xf32>
    %cst_24 = arith.constant dense<0.000000e+00> : vector<16x128xf32>
    %20 = tpu.matmul %19, %11, %cst_24 {dimension_numbers = #tpu.dot_dimension_numbers<[1], [0], [0], [1], [0, 0, 1, 1], [], []>} : vector<16x128xf32>, vector<128x128xf32>, vector<16x128xf32> -> vector<16x128xf32>
    %cst_25 = arith.constant dense<0.000000e+00> : vector<16x128xf32>
    %21 = tpu.matmul %5, %19, %cst_25 {dimension_numbers = #tpu.dot_dimension_numbers<[1], [0], [0], [1], [0, 0, 1, 1], [], []>} : vector<16x16xf32>, vector<16x128xf32>, vector<16x128xf32> -> vector<16x128xf32>
    %cst_26 = arith.constant dense<0.000000e+00> : vector<16x128xf32>
    %22 = tpu.matmul %21, %9, %cst_26 {dimension_numbers = #tpu.dot_dimension_numbers<[1], [0], [0], [1], [0, 0, 1, 1], [], []>} : vector<16x128xf32>, vector<128x128xf32>, vector<16x128xf32> -> vector<16x128xf32>
    %23 = arith.addf %20, %22 : vector<16x128xf32>
    %cst_27 = arith.constant dense<0.000000e+00> : vector<16x128xf32>
    %24 = tpu.matmul %7, %19, %cst_27 {dimension_numbers = #tpu.dot_dimension_numbers<[1], [0], [0], [1], [0, 0, 1, 1], [], []>} : vector<16x16xf32>, vector<16x128xf32>, vector<16x128xf32> -> vector<16x128xf32>
    %cst_28 = arith.constant dense<0.000000e+00> : vector<16x128xf32>
    %25 = tpu.matmul %24, %13, %cst_28 {dimension_numbers = #tpu.dot_dimension_numbers<[1], [0], [0], [1], [0, 0, 1, 1], [], []>} : vector<16x128xf32>, vector<128x128xf32>, vector<16x128xf32> -> vector<16x128xf32>
    %26 = arith.addf %23, %25 : vector<16x128xf32>
    %27 = vector.broadcast %14 : vector<1x128xf32> to vector<16x128xf32>
    %28 = arith.addf %26, %27 : vector<16x128xf32>
    %cst_29 = arith.constant 0.000000e+00 : f32
    %29 = vector.broadcast %cst_29 : f32 to vector<16x128xf32>
    %30 = arith.maximumf %28, %29 : vector<16x128xf32>
    %31 = vector.shape_cast %30 : vector<16x128xf32> to vector<2x8x128xf32>
    %cst_30 = arith.constant dense<0xFF800000> : vector<2x128xf32>
    %32 = vector.multi_reduction <maximumf>, %31, %cst_30 [1] : vector<2x8x128xf32> to vector<2x128xf32>
    %33 = vector.extract_strided_slice %32 {offsets = [0, 0], sizes = [2, 16], strides = [1, 1]} : vector<2x128xf32> to vector<2x16xf32>
    %34 = vector.extract_strided_slice %32 {offsets = [0, 16], sizes = [2, 16], strides = [1, 1]} : vector<2x128xf32> to vector<2x16xf32>
    %35 = arith.maximumf %33, %34 : vector<2x16xf32>
    %36 = vector.extract_strided_slice %32 {offsets = [0, 32], sizes = [2, 16], strides = [1, 1]} : vector<2x128xf32> to vector<2x16xf32>
    %37 = arith.maximumf %35, %36 : vector<2x16xf32>
    %38 = vector.extract_strided_slice %32 {offsets = [0, 48], sizes = [2, 16], strides = [1, 1]} : vector<2x128xf32> to vector<2x16xf32>
    %39 = arith.maximumf %37, %38 : vector<2x16xf32>
    %40 = vector.extract_strided_slice %32 {offsets = [0, 64], sizes = [2, 16], strides = [1, 1]} : vector<2x128xf32> to vector<2x16xf32>
    %41 = arith.maximumf %39, %40 : vector<2x16xf32>
    %42 = vector.extract_strided_slice %32 {offsets = [0, 80], sizes = [2, 16], strides = [1, 1]} : vector<2x128xf32> to vector<2x16xf32>
    %43 = arith.maximumf %41, %42 : vector<2x16xf32>
    %44 = vector.extract_strided_slice %32 {offsets = [0, 96], sizes = [2, 16], strides = [1, 1]} : vector<2x128xf32> to vector<2x16xf32>
    %45 = arith.maximumf %43, %44 : vector<2x16xf32>
    %46 = vector.extract_strided_slice %32 {offsets = [0, 112], sizes = [2, 16], strides = [1, 1]} : vector<2x128xf32> to vector<2x16xf32>
    %47 = arith.maximumf %45, %46 : vector<2x16xf32>
    %c0_31 = arith.constant 0 : index
    %c0_32 = arith.constant 0 : index
    %48 = vector.load %arg1[%c0_31, %c0_32] : memref<16x64xf32, #tpu.memory_space<vmem>>, vector<16x64xf32>
    %c1_33 = arith.constant 1 : index
    %c0_34 = arith.constant 0 : index
    %c0_35 = arith.constant 0 : index
    %49 = vector.load %arg3[%c1_33, %c0_34, %c0_35] : memref<3x128x128xf32, #tpu.memory_space<vmem>>, vector<1x64x128xf32>
    %50 = vector.shape_cast %49 : vector<1x64x128xf32> to vector<64x128xf32>
    %c1_36 = arith.constant 1 : index
    %c0_37 = arith.constant 0 : index
    %51 = vector.load %arg6[%c1_36, %c0_37] : memref<8x128xf32, #tpu.memory_space<vmem>>, vector<1x128xf32>
    %c2_38 = arith.constant 2 : index
    %c0_39 = arith.constant 0 : index
    %c0_40 = arith.constant 0 : index
    %52 = vector.load %arg5[%c2_38, %c0_39, %c0_40] : memref<4x16x16xf32, #tpu.memory_space<vmem>>, vector<1x16x16xf32>
    %53 = vector.shape_cast %52 : vector<1x16x16xf32> to vector<16x16xf32>
    %c3_41 = arith.constant 3 : index
    %c0_42 = arith.constant 0 : index
    %c0_43 = arith.constant 0 : index
    %54 = vector.load %arg5[%c3_41, %c0_42, %c0_43] : memref<4x16x16xf32, #tpu.memory_space<vmem>>, vector<1x16x16xf32>
    %55 = vector.shape_cast %54 : vector<1x16x16xf32> to vector<16x16xf32>
    %c1_44 = arith.constant 1 : index
    %c0_45 = arith.constant 0 : index
    %c0_46 = arith.constant 0 : index
    %c0_47 = arith.constant 0 : index
    %56 = vector.load %arg4[%c1_44, %c0_45, %c0_46, %c0_47] : memref<3x3x128x128xf32, #tpu.memory_space<vmem>>, vector<1x1x128x128xf32>
    %57 = vector.shape_cast %56 : vector<1x1x128x128xf32> to vector<128x128xf32>
    %c1_48 = arith.constant 1 : index
    %c1_49 = arith.constant 1 : index
    %c0_50 = arith.constant 0 : index
    %c0_51 = arith.constant 0 : index
    %58 = vector.load %arg4[%c1_48, %c1_49, %c0_50, %c0_51] : memref<3x3x128x128xf32, #tpu.memory_space<vmem>>, vector<1x1x128x128xf32>
    %59 = vector.shape_cast %58 : vector<1x1x128x128xf32> to vector<128x128xf32>
    %c1_52 = arith.constant 1 : index
    %c2_53 = arith.constant 2 : index
    %c0_54 = arith.constant 0 : index
    %c0_55 = arith.constant 0 : index
    %60 = vector.load %arg4[%c1_52, %c2_53, %c0_54, %c0_55] : memref<3x3x128x128xf32, #tpu.memory_space<vmem>>, vector<1x1x128x128xf32>
    %61 = vector.shape_cast %60 : vector<1x1x128x128xf32> to vector<128x128xf32>
    %c4 = arith.constant 4 : index
    %c0_56 = arith.constant 0 : index
    %62 = vector.load %arg6[%c4, %c0_56] : memref<8x128xf32, #tpu.memory_space<vmem>>, vector<1x128xf32>
    %cst_57 = arith.constant dense<0.000000e+00> : vector<16x128xf32>
    %63 = tpu.matmul %48, %50, %cst_57 {dimension_numbers = #tpu.dot_dimension_numbers<[1], [0], [0], [1], [0, 0, 1, 1], [], []>} : vector<16x64xf32>, vector<64x128xf32>, vector<16x128xf32> -> vector<16x128xf32>
    %64 = vector.broadcast %51 : vector<1x128xf32> to vector<16x128xf32>
    %65 = arith.addf %63, %64 : vector<16x128xf32>
    %cst_58 = arith.constant 0.000000e+00 : f32
    %66 = vector.broadcast %cst_58 : f32 to vector<16x128xf32>
    %67 = arith.maximumf %65, %66 : vector<16x128xf32>
    %cst_59 = arith.constant dense<0.000000e+00> : vector<16x128xf32>
    %68 = tpu.matmul %67, %59, %cst_59 {dimension_numbers = #tpu.dot_dimension_numbers<[1], [0], [0], [1], [0, 0, 1, 1], [], []>} : vector<16x128xf32>, vector<128x128xf32>, vector<16x128xf32> -> vector<16x128xf32>
    %cst_60 = arith.constant dense<0.000000e+00> : vector<16x128xf32>
    %69 = tpu.matmul %53, %67, %cst_60 {dimension_numbers = #tpu.dot_dimension_numbers<[1], [0], [0], [1], [0, 0, 1, 1], [], []>} : vector<16x16xf32>, vector<16x128xf32>, vector<16x128xf32> -> vector<16x128xf32>
    %cst_61 = arith.constant dense<0.000000e+00> : vector<16x128xf32>
    %70 = tpu.matmul %69, %57, %cst_61 {dimension_numbers = #tpu.dot_dimension_numbers<[1], [0], [0], [1], [0, 0, 1, 1], [], []>} : vector<16x128xf32>, vector<128x128xf32>, vector<16x128xf32> -> vector<16x128xf32>
    %71 = arith.addf %68, %70 : vector<16x128xf32>
    %cst_62 = arith.constant dense<0.000000e+00> : vector<16x128xf32>
    %72 = tpu.matmul %55, %67, %cst_62 {dimension_numbers = #tpu.dot_dimension_numbers<[1], [0], [0], [1], [0, 0, 1, 1], [], []>} : vector<16x16xf32>, vector<16x128xf32>, vector<16x128xf32> -> vector<16x128xf32>
    %cst_63 = arith.constant dense<0.000000e+00> : vector<16x128xf32>
    %73 = tpu.matmul %72, %61, %cst_63 {dimension_numbers = #tpu.dot_dimension_numbers<[1], [0], [0], [1], [0, 0, 1, 1], [], []>} : vector<16x128xf32>, vector<128x128xf32>, vector<16x128xf32> -> vector<16x128xf32>
    %74 = arith.addf %71, %73 : vector<16x128xf32>
    %75 = vector.broadcast %62 : vector<1x128xf32> to vector<16x128xf32>
    %76 = arith.addf %74, %75 : vector<16x128xf32>
    %cst_64 = arith.constant 0.000000e+00 : f32
    %77 = vector.broadcast %cst_64 : f32 to vector<16x128xf32>
    %78 = arith.maximumf %76, %77 : vector<16x128xf32>
    %79 = tpu.iota {dimensions = array<i32: 0>} : vector<16x128xi32>
    %c8_i32 = arith.constant 8 : i32
    %c0_i32 = arith.constant 0 : i32
    %80 = arith.cmpi eq, %c8_i32, %c0_i32 : i32
    %c1_i32 = arith.constant 1 : i32
    %81 = arith.select %80, %c1_i32, %c8_i32 : i32
    %82 = vector.broadcast %81 : i32 to vector<16x128xi32>
    %83 = arith.remsi %79, %82 : vector<16x128xi32>
    %c0_i32_65 = arith.constant 0 : i32
    %84 = vector.broadcast %c0_i32_65 : i32 to vector<16x128xi32>
    %85 = arith.cmpi ne, %83, %84 : vector<16x128xi32>
    %c0_i32_66 = arith.constant 0 : i32
    %86 = vector.broadcast %c0_i32_66 : i32 to vector<16x128xi32>
    %87 = arith.cmpi slt, %83, %86 : vector<16x128xi32>
    %c0_i32_67 = arith.constant 0 : i32
    %88 = arith.cmpi slt, %81, %c0_i32_67 : i32
    %89 = vector.broadcast %88 : i1 to vector<16x128xi1>
    %90 = vector.broadcast %89 : vector<16x128xi1> to vector<16x128xi1>
    %91 = arith.xori %87, %90 : vector<16x128xi1>
    %92 = arith.andi %91, %85 : vector<16x128xi1>
    %93 = vector.broadcast %81 : i32 to vector<16x128xi32>
    %94 = arith.addi %83, %93 : vector<16x128xi32>
    %95 = arith.select %92, %94, %83 : vector<16x128xi1>, vector<16x128xi32>
    %c4_i32 = arith.constant 4 : i32
    %96 = vector.broadcast %c4_i32 : i32 to vector<16x128xi32>
    %97 = arith.cmpi slt, %95, %96 : vector<16x128xi32>
    %cst_68 = arith.constant 0.000000e+00 : f32
    %98 = vector.broadcast %cst_68 : f32 to vector<16x128xf32>
    %99 = arith.select %97, %78, %98 : vector<16x128xi1>, vector<16x128xf32>
    %100 = vector.shape_cast %99 : vector<16x128xf32> to vector<2x8x128xf32>
    %cst_69 = arith.constant dense<0xFF800000> : vector<2x128xf32>
    %101 = vector.multi_reduction <maximumf>, %100, %cst_69 [1] : vector<2x8x128xf32> to vector<2x128xf32>
    %102 = vector.extract_strided_slice %101 {offsets = [0, 0], sizes = [2, 16], strides = [1, 1]} : vector<2x128xf32> to vector<2x16xf32>
    %103 = vector.extract_strided_slice %101 {offsets = [0, 16], sizes = [2, 16], strides = [1, 1]} : vector<2x128xf32> to vector<2x16xf32>
    %104 = arith.maximumf %102, %103 : vector<2x16xf32>
    %105 = vector.extract_strided_slice %101 {offsets = [0, 32], sizes = [2, 16], strides = [1, 1]} : vector<2x128xf32> to vector<2x16xf32>
    %106 = arith.maximumf %104, %105 : vector<2x16xf32>
    %107 = vector.extract_strided_slice %101 {offsets = [0, 48], sizes = [2, 16], strides = [1, 1]} : vector<2x128xf32> to vector<2x16xf32>
    %108 = arith.maximumf %106, %107 : vector<2x16xf32>
    %c0_70 = arith.constant 0 : index
    %c0_71 = arith.constant 0 : index
    %109 = vector.load %arg2[%c0_70, %c0_71] : memref<16x128xf32, #tpu.memory_space<vmem>>, vector<16x128xf32>
    %c2_72 = arith.constant 2 : index
    %c0_73 = arith.constant 0 : index
    %c0_74 = arith.constant 0 : index
    %110 = vector.load %arg3[%c2_72, %c0_73, %c0_74] : memref<3x128x128xf32, #tpu.memory_space<vmem>>, vector<1x128x128xf32>
    %111 = vector.shape_cast %110 : vector<1x128x128xf32> to vector<128x128xf32>
    %c2_75 = arith.constant 2 : index
    %c0_76 = arith.constant 0 : index
    %112 = vector.load %arg6[%c2_75, %c0_76] : memref<8x128xf32, #tpu.memory_space<vmem>>, vector<1x128xf32>
    %c2_77 = arith.constant 2 : index
    %c0_78 = arith.constant 0 : index
    %c0_79 = arith.constant 0 : index
    %113 = vector.load %arg5[%c2_77, %c0_78, %c0_79] : memref<4x16x16xf32, #tpu.memory_space<vmem>>, vector<1x16x16xf32>
    %114 = vector.shape_cast %113 : vector<1x16x16xf32> to vector<16x16xf32>
    %c3_80 = arith.constant 3 : index
    %c0_81 = arith.constant 0 : index
    %c0_82 = arith.constant 0 : index
    %115 = vector.load %arg5[%c3_80, %c0_81, %c0_82] : memref<4x16x16xf32, #tpu.memory_space<vmem>>, vector<1x16x16xf32>
    %116 = vector.shape_cast %115 : vector<1x16x16xf32> to vector<16x16xf32>
    %c2_83 = arith.constant 2 : index
    %c0_84 = arith.constant 0 : index
    %c0_85 = arith.constant 0 : index
    %c0_86 = arith.constant 0 : index
    %117 = vector.load %arg4[%c2_83, %c0_84, %c0_85, %c0_86] : memref<3x3x128x128xf32, #tpu.memory_space<vmem>>, vector<1x1x128x128xf32>
    %118 = vector.shape_cast %117 : vector<1x1x128x128xf32> to vector<128x128xf32>
    %c2_87 = arith.constant 2 : index
    %c1_88 = arith.constant 1 : index
    %c0_89 = arith.constant 0 : index
    %c0_90 = arith.constant 0 : index
    %119 = vector.load %arg4[%c2_87, %c1_88, %c0_89, %c0_90] : memref<3x3x128x128xf32, #tpu.memory_space<vmem>>, vector<1x1x128x128xf32>
    %120 = vector.shape_cast %119 : vector<1x1x128x128xf32> to vector<128x128xf32>
    %c2_91 = arith.constant 2 : index
    %c2_92 = arith.constant 2 : index
    %c0_93 = arith.constant 0 : index
    %c0_94 = arith.constant 0 : index
    %121 = vector.load %arg4[%c2_91, %c2_92, %c0_93, %c0_94] : memref<3x3x128x128xf32, #tpu.memory_space<vmem>>, vector<1x1x128x128xf32>
    %122 = vector.shape_cast %121 : vector<1x1x128x128xf32> to vector<128x128xf32>
    %c5 = arith.constant 5 : index
    %c0_95 = arith.constant 0 : index
    %123 = vector.load %arg6[%c5, %c0_95] : memref<8x128xf32, #tpu.memory_space<vmem>>, vector<1x128xf32>
    %cst_96 = arith.constant dense<0.000000e+00> : vector<16x128xf32>
    %124 = tpu.matmul %109, %111, %cst_96 {dimension_numbers = #tpu.dot_dimension_numbers<[1], [0], [0], [1], [0, 0, 1, 1], [], []>} : vector<16x128xf32>, vector<128x128xf32>, vector<16x128xf32> -> vector<16x128xf32>
    %125 = vector.broadcast %112 : vector<1x128xf32> to vector<16x128xf32>
    %126 = arith.addf %124, %125 : vector<16x128xf32>
    %cst_97 = arith.constant 0.000000e+00 : f32
    %127 = vector.broadcast %cst_97 : f32 to vector<16x128xf32>
    %128 = arith.maximumf %126, %127 : vector<16x128xf32>
    %cst_98 = arith.constant dense<0.000000e+00> : vector<16x128xf32>
    %129 = tpu.matmul %128, %120, %cst_98 {dimension_numbers = #tpu.dot_dimension_numbers<[1], [0], [0], [1], [0, 0, 1, 1], [], []>} : vector<16x128xf32>, vector<128x128xf32>, vector<16x128xf32> -> vector<16x128xf32>
    %cst_99 = arith.constant dense<0.000000e+00> : vector<16x128xf32>
    %130 = tpu.matmul %114, %128, %cst_99 {dimension_numbers = #tpu.dot_dimension_numbers<[1], [0], [0], [1], [0, 0, 1, 1], [], []>} : vector<16x16xf32>, vector<16x128xf32>, vector<16x128xf32> -> vector<16x128xf32>
    %cst_100 = arith.constant dense<0.000000e+00> : vector<16x128xf32>
    %131 = tpu.matmul %130, %118, %cst_100 {dimension_numbers = #tpu.dot_dimension_numbers<[1], [0], [0], [1], [0, 0, 1, 1], [], []>} : vector<16x128xf32>, vector<128x128xf32>, vector<16x128xf32> -> vector<16x128xf32>
    %132 = arith.addf %129, %131 : vector<16x128xf32>
    %cst_101 = arith.constant dense<0.000000e+00> : vector<16x128xf32>
    %133 = tpu.matmul %116, %128, %cst_101 {dimension_numbers = #tpu.dot_dimension_numbers<[1], [0], [0], [1], [0, 0, 1, 1], [], []>} : vector<16x16xf32>, vector<16x128xf32>, vector<16x128xf32> -> vector<16x128xf32>
    %cst_102 = arith.constant dense<0.000000e+00> : vector<16x128xf32>
    %134 = tpu.matmul %133, %122, %cst_102 {dimension_numbers = #tpu.dot_dimension_numbers<[1], [0], [0], [1], [0, 0, 1, 1], [], []>} : vector<16x128xf32>, vector<128x128xf32>, vector<16x128xf32> -> vector<16x128xf32>
    %135 = arith.addf %132, %134 : vector<16x128xf32>
    %136 = vector.broadcast %123 : vector<1x128xf32> to vector<16x128xf32>
    %137 = arith.addf %135, %136 : vector<16x128xf32>
    %cst_103 = arith.constant 0.000000e+00 : f32
    %138 = vector.broadcast %cst_103 : f32 to vector<16x128xf32>
    %139 = arith.maximumf %137, %138 : vector<16x128xf32>
    %140 = tpu.iota {dimensions = array<i32: 0>} : vector<16x128xi32>
    %c8_i32_104 = arith.constant 8 : i32
    %c0_i32_105 = arith.constant 0 : i32
    %141 = arith.cmpi eq, %c8_i32_104, %c0_i32_105 : i32
    %c1_i32_106 = arith.constant 1 : i32
    %142 = arith.select %141, %c1_i32_106, %c8_i32_104 : i32
    %143 = vector.broadcast %142 : i32 to vector<16x128xi32>
    %144 = arith.remsi %140, %143 : vector<16x128xi32>
    %c0_i32_107 = arith.constant 0 : i32
    %145 = vector.broadcast %c0_i32_107 : i32 to vector<16x128xi32>
    %146 = arith.cmpi ne, %144, %145 : vector<16x128xi32>
    %c0_i32_108 = arith.constant 0 : i32
    %147 = vector.broadcast %c0_i32_108 : i32 to vector<16x128xi32>
    %148 = arith.cmpi slt, %144, %147 : vector<16x128xi32>
    %c0_i32_109 = arith.constant 0 : i32
    %149 = arith.cmpi slt, %142, %c0_i32_109 : i32
    %150 = vector.broadcast %149 : i1 to vector<16x128xi1>
    %151 = vector.broadcast %150 : vector<16x128xi1> to vector<16x128xi1>
    %152 = arith.xori %148, %151 : vector<16x128xi1>
    %153 = arith.andi %152, %146 : vector<16x128xi1>
    %154 = vector.broadcast %142 : i32 to vector<16x128xi32>
    %155 = arith.addi %144, %154 : vector<16x128xi32>
    %156 = arith.select %153, %155, %144 : vector<16x128xi1>, vector<16x128xi32>
    %c4_i32_110 = arith.constant 4 : i32
    %157 = vector.broadcast %c4_i32_110 : i32 to vector<16x128xi32>
    %158 = arith.cmpi slt, %156, %157 : vector<16x128xi32>
    %cst_111 = arith.constant 0.000000e+00 : f32
    %159 = vector.broadcast %cst_111 : f32 to vector<16x128xf32>
    %160 = arith.select %158, %139, %159 : vector<16x128xi1>, vector<16x128xf32>
    %161 = vector.shape_cast %160 : vector<16x128xf32> to vector<2x8x128xf32>
    %cst_112 = arith.constant dense<0xFF800000> : vector<2x128xf32>
    %162 = vector.multi_reduction <maximumf>, %161, %cst_112 [1] : vector<2x8x128xf32> to vector<2x128xf32>
    %163 = vector.extract_strided_slice %162 {offsets = [0, 0], sizes = [2, 16], strides = [1, 1]} : vector<2x128xf32> to vector<2x16xf32>
    %164 = vector.extract_strided_slice %162 {offsets = [0, 16], sizes = [2, 16], strides = [1, 1]} : vector<2x128xf32> to vector<2x16xf32>
    %165 = arith.maximumf %163, %164 : vector<2x16xf32>
    %166 = vector.extract_strided_slice %162 {offsets = [0, 32], sizes = [2, 16], strides = [1, 1]} : vector<2x128xf32> to vector<2x16xf32>
    %167 = arith.maximumf %165, %166 : vector<2x16xf32>
    %168 = vector.extract_strided_slice %162 {offsets = [0, 48], sizes = [2, 16], strides = [1, 1]} : vector<2x128xf32> to vector<2x16xf32>
    %169 = arith.maximumf %167, %168 : vector<2x16xf32>
    %c0_113 = arith.constant 0 : index
    %c0_114 = arith.constant 0 : index
    %c0_115 = arith.constant 0 : index
    %170 = vector.load %arg7[%c0_113, %c0_114, %c0_115] : memref<3x16x128xf32, #tpu.memory_space<vmem>>, vector<1x16x128xf32>
    %171 = vector.shape_cast %170 : vector<1x16x128xf32> to vector<16x128xf32>
    %cst_116 = arith.constant dense<0.000000e+00> : vector<2x128xf32>
    %172 = tpu.matmul %47, %171, %cst_116 {dimension_numbers = #tpu.dot_dimension_numbers<[1], [0], [0], [1], [0, 0, 1, 1], [], []>} : vector<2x16xf32>, vector<16x128xf32>, vector<2x128xf32> -> vector<2x128xf32>
    %c1_117 = arith.constant 1 : index
    %c0_118 = arith.constant 0 : index
    %c0_119 = arith.constant 0 : index
    %173 = vector.load %arg7[%c1_117, %c0_118, %c0_119] : memref<3x16x128xf32, #tpu.memory_space<vmem>>, vector<1x16x128xf32>
    %174 = vector.shape_cast %173 : vector<1x16x128xf32> to vector<16x128xf32>
    %cst_120 = arith.constant dense<0.000000e+00> : vector<2x128xf32>
    %175 = tpu.matmul %108, %174, %cst_120 {dimension_numbers = #tpu.dot_dimension_numbers<[1], [0], [0], [1], [0, 0, 1, 1], [], []>} : vector<2x16xf32>, vector<16x128xf32>, vector<2x128xf32> -> vector<2x128xf32>
    %176 = arith.addf %172, %175 : vector<2x128xf32>
    %c2_121 = arith.constant 2 : index
    %c0_122 = arith.constant 0 : index
    %c0_123 = arith.constant 0 : index
    %177 = vector.load %arg7[%c2_121, %c0_122, %c0_123] : memref<3x16x128xf32, #tpu.memory_space<vmem>>, vector<1x16x128xf32>
    %178 = vector.shape_cast %177 : vector<1x16x128xf32> to vector<16x128xf32>
    %cst_124 = arith.constant dense<0.000000e+00> : vector<2x128xf32>
    %179 = tpu.matmul %169, %178, %cst_124 {dimension_numbers = #tpu.dot_dimension_numbers<[1], [0], [0], [1], [0, 0, 1, 1], [], []>} : vector<2x16xf32>, vector<16x128xf32>, vector<2x128xf32> -> vector<2x128xf32>
    %180 = arith.addf %176, %179 : vector<2x128xf32>
    %c6 = arith.constant 6 : index
    %c0_125 = arith.constant 0 : index
    %181 = vector.load %arg6[%c6, %c0_125] : memref<8x128xf32, #tpu.memory_space<vmem>>, vector<1x128xf32>
    %182 = vector.broadcast %181 : vector<1x128xf32> to vector<2x128xf32>
    %183 = arith.addf %180, %182 : vector<2x128xf32>
    %cst_126 = arith.constant 0.000000e+00 : f32
    %184 = vector.broadcast %cst_126 : f32 to vector<2x128xf32>
    %185 = arith.maximumf %183, %184 : vector<2x128xf32>
    %cst_127 = arith.constant 0.000000e+00 : f32
    %186 = vector.broadcast %cst_127 : f32 to vector<2x128xf32>
    %187 = arith.minimumf %183, %186 : vector<2x128xf32>
    %188 = math.exp %187 : vector<2x128xf32>
    %189 = arith.addf %185, %188 : vector<2x128xf32>
    %cst_128 = arith.constant 1.000000e+00 : f32
    %190 = vector.broadcast %cst_128 : f32 to vector<2x128xf32>
    %191 = arith.subf %189, %190 : vector<2x128xf32>
    %c0_129 = arith.constant 0 : index
    %c0_130 = arith.constant 0 : index
    %192 = vector.load %arg8[%c0_129, %c0_130] : memref<128x128xf32, #tpu.memory_space<vmem>>, vector<128x128xf32>
    %cst_131 = arith.constant dense<0.000000e+00> : vector<2x128xf32>
    %193 = tpu.matmul %191, %192, %cst_131 {dimension_numbers = #tpu.dot_dimension_numbers<[1], [0], [0], [1], [0, 0, 1, 1], [], []>} : vector<2x128xf32>, vector<128x128xf32>, vector<2x128xf32> -> vector<2x128xf32>
    %c7 = arith.constant 7 : index
    %c0_132 = arith.constant 0 : index
    %194 = vector.load %arg6[%c7, %c0_132] : memref<8x128xf32, #tpu.memory_space<vmem>>, vector<1x128xf32>
    %195 = vector.broadcast %194 : vector<1x128xf32> to vector<2x128xf32>
    %196 = arith.addf %193, %195 : vector<2x128xf32>
    %c0_133 = arith.constant 0 : index
    %c0_134 = arith.constant 0 : index
    %197 = vector.load %arg9[%c0_133, %c0_134] : memref<2x128xf32, #tpu.memory_space<vmem>>, vector<2x128xf32>
    tpu.vector_store %arg9[%c0_133, %c0_134], %196 {strides = array<i32>} : memref<2x128xf32, #tpu.memory_space<vmem>>, vector<2x128xf32>,
    %c0_135 = arith.constant 0 : index
    %c0_136 = arith.constant 0 : index
    %c0_137 = arith.constant 0 : index
    %198 = vector.load %arg10[%c0_135, %c0_136, %c0_137] : memref<3x2x16xf32, #tpu.memory_space<vmem>>, vector<1x2x16xf32>
    %199 = vector.shape_cast %198 : vector<1x2x16xf32> to vector<2x16xf32>
    %200 = vector.shape_cast %47 : vector<2x16xf32> to vector<1x2x16xf32>
    tpu.vector_store %arg10[%c0_135, %c0_136, %c0_137], %200 {strides = array<i32>} : memref<3x2x16xf32, #tpu.memory_space<vmem>>, vector<1x2x16xf32>,
    %c1_138 = arith.constant 1 : index
    %c0_139 = arith.constant 0 : index
    %c0_140 = arith.constant 0 : index
    %201 = vector.load %arg10[%c1_138, %c0_139, %c0_140] : memref<3x2x16xf32, #tpu.memory_space<vmem>>, vector<1x2x16xf32>
    %202 = vector.shape_cast %201 : vector<1x2x16xf32> to vector<2x16xf32>
    %203 = vector.shape_cast %108 : vector<2x16xf32> to vector<1x2x16xf32>
    tpu.vector_store %arg10[%c1_138, %c0_139, %c0_140], %203 {strides = array<i32>} : memref<3x2x16xf32, #tpu.memory_space<vmem>>, vector<1x2x16xf32>,
    %c2_141 = arith.constant 2 : index
    %c0_142 = arith.constant 0 : index
    %c0_143 = arith.constant 0 : index
    %204 = vector.load %arg10[%c2_141, %c0_142, %c0_143] : memref<3x2x16xf32, #tpu.memory_space<vmem>>, vector<1x2x16xf32>
    %205 = vector.shape_cast %204 : vector<1x2x16xf32> to vector<2x16xf32>
    %206 = vector.shape_cast %169 : vector<2x16xf32> to vector<1x2x16xf32>
    tpu.vector_store %arg10[%c2_141, %c0_142, %c0_143], %206 {strides = array<i32>} : memref<3x2x16xf32, #tpu.memory_space<vmem>>, vector<1x2x16xf32>,
    return
  }
}

</mosaic_0001>

<llo_original>
// kernel: cnn_net_forward.1
$region0: #{cnn_net_forward.1}
  #allocation0 [shape = 'u32[]', space=smem, size = 0x4, offset = 0x4, fixed_abs, tag = 'smem constant byte address 0x4 - core index']
  #allocation1 [shape = 'u32[144,128]{1,0:T(1,128)}', space=vmem, size = 0x12000, scoped, tag = 'internal scratch']
  %s0 = inlined_call_operand.vmem [shape: f32[16,64], index: 0, kind: input, shape index: {}]
  %s1 = inlined_call_operand.vmem [shape: f32[16,64], index: 1, kind: input, shape index: {}]
  %s2 = inlined_call_operand.vmem [shape: f32[16,128], index: 2, kind: input, shape index: {}]
  %s3 = inlined_call_operand.vmem [shape: f32[3,128,128], index: 3, kind: input, shape index: {}]
  %s4 = inlined_call_operand.vmem [shape: f32[3,3,128,128], index: 4, kind: input, shape index: {}]
  %s5 = inlined_call_operand.vmem [shape: f32[4,16,16], index: 5, kind: input, shape index: {}]
  %s6 = inlined_call_operand.vmem [shape: f32[8,128], index: 6, kind: input, shape index: {}]
  %s7 = inlined_call_operand.vmem [shape: f32[3,16,128], index: 7, kind: input, shape index: {}]
  %s8 = inlined_call_operand.vmem [shape: f32[128,128], index: 8, kind: input, shape index: {}]
  %s9 = inlined_call_operand.vmem [shape: f32[2,128], index: 9, kind: output, shape index: {0}]
  %s10 = inlined_call_operand.vmem [shape: f32[3,2,16], index: 10, kind: output, shape index: {1}]
  %11 = xla_tuple %s9, %s10
  %s12 = sld [smem:[#allocation0]]
  $region54: #{cnn_net_forward.1} parent=0
    _
  %s14 = ssub.s32 1, %s12
  %s15 = scalar_select 0, %s14, %s12
  // Predicated region
  $region2: #{cnn_net_forward.1} parent=0 // pred_check
    _
  $region3: #{cnn_net_forward.1} parent=0 // pred_check_branch
    %17 = sbr.rel (0) target = $region5
  $region4: #{cnn_net_forward.1} parent=0 // pred_region
    _
  $region5: #{cnn_net_forward.1} parent=0 // pred_fallthru
    _
  // Predicated region
  $region6: #{cnn_net_forward.1} parent=0 // pred_check
    _
  $region7: #{cnn_net_forward.1} parent=0 // pred_check_branch
    %19 = sbr.rel (0) target = $region9
  $region8: #{cnn_net_forward.1} parent=0 // pred_region
    _
  $region9: #{cnn_net_forward.1} parent=0 // pred_fallthru
    _
  // Predicated region
  $region10: #{cnn_net_forward.1} parent=0 // pred_check
    _
  $region11: #{cnn_net_forward.1} parent=0 // pred_check_branch
    %21 = sbr.rel (0) target = $region13
  $region12: #{cnn_net_forward.1} parent=0 // pred_region
    _
  $region13: #{cnn_net_forward.1} parent=0 // pred_fallthru
    _
  // Predicated region
  $region14: #{cnn_net_forward.1} parent=0 // pred_check
    _
  $region15: #{cnn_net_forward.1} parent=0 // pred_check_branch
    %23 = sbr.rel (0) target = $region17
  $region16: #{cnn_net_forward.1} parent=0 // pred_region
    _
  $region17: #{cnn_net_forward.1} parent=0 // pred_fallthru
    _
  // Predicated region
  $region18: #{cnn_net_forward.1} parent=0 // pred_check
    _
  $region19: #{cnn_net_forward.1} parent=0 // pred_check_branch
    %25 = sbr.rel (0) target = $region21
  $region20: #{cnn_net_forward.1} parent=0 // pred_region
    _
  $region21: #{cnn_net_forward.1} parent=0 // pred_fallthru
    _
  // Predicated region
  $region22: #{cnn_net_forward.1} parent=0 // pred_check
    _
  $region23: #{cnn_net_forward.1} parent=0 // pred_check_branch
    %27 = sbr.rel (0) target = $region25
  $region24: #{cnn_net_forward.1} parent=0 // pred_region
    _
  $region25: #{cnn_net_forward.1} parent=0 // pred_fallthru
    _
  // Predicated region
  $region26: #{cnn_net_forward.1} parent=0 // pred_check
    _
  $region27: #{cnn_net_forward.1} parent=0 // pred_check_branch
    %29 = sbr.rel (0) target = $region29
  $region28: #{cnn_net_forward.1} parent=0 // pred_region
    _
  $region29: #{cnn_net_forward.1} parent=0 // pred_fallthru
    _
  // Predicated region
  $region30: #{cnn_net_forward.1} parent=0 // pred_check
    _
  $region31: #{cnn_net_forward.1} parent=0 // pred_check_branch
    %31 = sbr.rel (0) target = $region33
  $region32: #{cnn_net_forward.1} parent=0 // pred_region
    _
  $region33: #{cnn_net_forward.1} parent=0 // pred_fallthru
    _
  // Predicated region
  $region34: #{cnn_net_forward.1} parent=0 // pred_check
    _
  $region35: #{cnn_net_forward.1} parent=0 // pred_check_branch
    %33 = sbr.rel (0) target = $region37
  $region36: #{cnn_net_forward.1} parent=0 // pred_region
    _
  $region37: #{cnn_net_forward.1} parent=0 // pred_fallthru
    _
  %v34 = vld [vmem:[%s0] sm:$0xff]
  %v35 = vld [vmem:[%s0 + $0x8] sm:$0xff]
  %v36 = vld [vmem:[%s3] sm:$0xff]
  %v37 = vld [vmem:[%s3 + $0x8] sm:$0xff]
  %v38 = vld [vmem:[%s3 + $0x10] sm:$0xff]
  %v39 = vld [vmem:[%s3 + $0x18] sm:$0xff]
  %v40 = vld [vmem:[%s3 + $0x20] sm:$0xff]
  %v41 = vld [vmem:[%s3 + $0x28] sm:$0xff]
  %v42 = vld [vmem:[%s3 + $0x30] sm:$0xff]
  %v43 = vld [vmem:[%s3 + $0x38] sm:$0xff]
  %v44 = vld [vmem:[%s6] sm:$0x1]
  %v45 = vld [vmem:[%s5] sm:$0xff]
  %v46 = vld [vmem:[%s5 + $0x8] sm:$0xff]
  %s47 = scalar_lea.vmem %s5, 16
  %v48 = vld [vmem:[%s47] sm:$0xff]
  %v49 = vld [vmem:[%s47 + $0x8] sm:$0xff]
  %v50 = vld [vmem:[%s4] sm:$0xff]
  %v51 = vld [vmem:[%s4 + $0x8] sm:$0xff]
  %v52 = vld [vmem:[%s4 + $0x10] sm:$0xff]
  %v53 = vld [vmem:[%s4 + $0x18] sm:$0xff]
  %v54 = vld [vmem:[%s4 + $0x20] sm:$0xff]
  %v55 = vld [vmem:[%s4 + $0x28] sm:$0xff]
  %v56 = vld [vmem:[%s4 + $0x30] sm:$0xff]
  %v57 = vld [vmem:[%s4 + $0x38] sm:$0xff]
  %v58 = vld [vmem:[%s4 + $0x40] sm:$0xff]
  %v59 = vld [vmem:[%s4 + $0x48] sm:$0xff]
  %v60 = vld [vmem:[%s4 + $0x50] sm:$0xff]
  %v61 = vld [vmem:[%s4 + $0x58] sm:$0xff]
  %v62 = vld [vmem:[%s4 + $0x60] sm:$0xff]
  %v63 = vld [vmem:[%s4 + $0x68] sm:$0xff]
  %v64 = vld [vmem:[%s4 + $0x70] sm:$0xff]
  %v65 = vld [vmem:[%s4 + $0x78] sm:$0xff]
  %s66 = scalar_lea.vmem %s4, 128
  %v67 = vld [vmem:[%s66] sm:$0xff]
  %v68 = vld [vmem:[%s66 + $0x8] sm:$0xff]
  %v69 = vld [vmem:[%s66 + $0x10] sm:$0xff]
  %v70 = vld [vmem:[%s66 + $0x18] sm:$0xff]
  %v71 = vld [vmem:[%s66 + $0x20] sm:$0xff]
  %v72 = vld [vmem:[%s66 + $0x28] sm:$0xff]
  %v73 = vld [vmem:[%s66 + $0x30] sm:$0xff]
  %v74 = vld [vmem:[%s66 + $0x38] sm:$0xff]
  %v75 = vld [vmem:[%s66 + $0x40] sm:$0xff]
  %v76 = vld [vmem:[%s66 + $0x48] sm:$0xff]
  %v77 = vld [vmem:[%s66 + $0x50] sm:$0xff]
  %v78 = vld [vmem:[%s66 + $0x58] sm:$0xff]
  %v79 = vld [vmem:[%s66 + $0x60] sm:$0xff]
  %v80 = vld [vmem:[%s66 + $0x68] sm:$0xff]
  %v81 = vld [vmem:[%s66 + $0x70] sm:$0xff]
  %v82 = vld [vmem:[%s66 + $0x78] sm:$0xff]
  %s83 = scalar_lea.vmem %s4, 256
  %v84 = vld [vmem:[%s83] sm:$0xff]
  %v85 = vld [vmem:[%s83 + $0x8] sm:$0xff]
  %v86 = vld [vmem:[%s83 + $0x10] sm:$0xff]
  %v87 = vld [vmem:[%s83 + $0x18] sm:$0xff]
  %v88 = vld [vmem:[%s83 + $0x20] sm:$0xff]
  %v89 = vld [vmem:[%s83 + $0x28] sm:$0xff]
  %v90 = vld [vmem:[%s83 + $0x30] sm:$0xff]
  %v91 = vld [vmem:[%s83 + $0x38] sm:$0xff]
  %v92 = vld [vmem:[%s83 + $0x40] sm:$0xff]
  %v93 = vld [vmem:[%s83 + $0x48] sm:$0xff]
  %v94 = vld [vmem:[%s83 + $0x50] sm:$0xff]
  %v95 = vld [vmem:[%s83 + $0x58] sm:$0xff]
  %v96 = vld [vmem:[%s83 + $0x60] sm:$0xff]
  %v97 = vld [vmem:[%s83 + $0x68] sm:$0xff]
  %v98 = vld [vmem:[%s83 + $0x70] sm:$0xff]
  %v99 = vld [vmem:[%s83 + $0x78] sm:$0xff]
  %v100 = vld [vmem:[%s6 + $0x3] sm:$0x1]
  %v101 = vlaneseq
  %v102 = vshrl.u32 %v101, 7
  %v103 = vsub.s32 0, %v102
  %v104 = vrot.slane %v44, %v103
  %vm105 = vcmask 523264
  %v107 = vsel %vm105, %v34, 0
  %v110 = vsel %vm105, %v35, 0
  %112 = vmatprep.subr.mxu0 0.0
  %113 = vmatpush1.msra.mxu0 %v36
  %114 = vmatprep.subr.mxu0 0.0
  %115 = vmatpush1.msra.mxu0 %v37
  %116 = vmatprep.subr.mxu0 0.0
  %117 = vmatpush1.msra.mxu0 %v38
  %118 = vmatprep.subr.mxu0 0.0
  %119 = vmatpush1.msra.mxu0 %v39
  %120 = vmatprep.subr.mxu0 0.0
  %121 = vmatpush1.msra.mxu0 %v40
  %122 = vmatprep.subr.mxu0 0.0
  %123 = vmatpush1.msra.mxu0 %v41
  %124 = vmatprep.subr.mxu0 0.0
  %125 = vmatpush1.msra.mxu0 %v42
  %126 = vmatprep.subr.mxu0 0.0
  %127 = vmatpush1.msra.mxu0 %v43
  %128 = vmatprep.subr.mxu0 0.0
  %129 = vmatpush1.msra.mxu0 0.0
  %130 = vmatprep.subr.mxu0 0.0
  %131 = vmatpush1.msra.mxu0 0.0
  %132 = vmatprep.subr.mxu0 0.0
  %133 = vmatpush1.msra.mxu0 0.0
  %134 = vmatprep.subr.mxu0 0.0
  %135 = vmatpush1.msra.mxu0 0.0
  %136 = vmatprep.subr.mxu0 0.0
  %137 = vmatpush1.msra.mxu0 0.0
  %138 = vmatprep.subr.mxu0 0.0
  %139 = vmatpush1.msra.mxu0 0.0
  %140 = vmatprep.subr.mxu0 0.0
  %141 = vmatpush1.msra.mxu0 0.0
  %142 = vmatprep.subr.mxu0 0.0
  %143 = vmatpush1.msra.mxu0 0.0
  %144 = vmatprep.subr.mxu0 0.0
  %145 = vmatpush1.msra.mxu0 0.0
  %146 = vmatprep.subr.mxu0 0.0
  %147 = vmatpush1.msra.mxu0 0.0
  %148 = vmatprep.subr.mxu0 0.0
  %149 = vmatpush1.msra.mxu0 0.0
  %150 = vmatprep.subr.mxu0 0.0
  %151 = vmatpush1.msra.mxu0 0.0
  %152 = vmatprep.subr.mxu0 0.0
  %153 = vmatpush1.msra.mxu0 0.0
  %154 = vmatprep.subr.mxu0 0.0
  %155 = vmatpush1.msra.mxu0 0.0
  %156 = vmatprep.subr.mxu0 0.0
  %157 = vmatpush1.msra.mxu0 0.0
  %158 = vmatprep.subr.mxu0 0.0
  %159 = vmatpush1.msra.mxu0 0.0
  %160 = vmatprep.subr.mxu0 0.0
  %161 = vmatpush1.msra.mxu0 0.0
  %162 = vmatprep.subr.mxu0 0.0
  %163 = vmatpush1.msra.mxu0 0.0
  %164 = vmatprep.subr.mxu0 0.0
  %165 = vmatpush1.msra.mxu0 0.0
  %166 = vmatprep.subr.mxu0 0.0
  %167 = vmatpush1.msra.mxu0 0.0
  %168 = vmatprep.subr.mxu0 0.0
  %169 = vmatpush1.msra.mxu0 0.0
  %170 = vmatprep.subr.mxu0 0.0
  %171 = vmatpush1.msra.mxu0 0.0
  %172 = vmatprep.subr.mxu0 0.0
  %173 = vmatpush1.msra.mxu0 0.0
  %174 = vmatprep.subr.mxu0 0.0
  %175 = vmatpush1.msra.mxu0 0.0
  %176 = vmatprep.mubr.f32.mxu0 0.0
  %177 = vmatmul.mubr.f32.gmra.mrb[0].mxu0 %v107
  %v178 = vpop.f32.mrb[0].mxu0
  %v179 = vadd.f32 %v104, %v178
  %v180 = vpop.f32.mrb[0].mxu0
  %181 = vmatprep.mubr.f32.mxu0 0.0
  %182 = vmatmul.mubr.f32.gmra.mrb[0].mxu0 %v110
  %v183 = vpop.f32.mrb[0].mxu0
  %v184 = vadd.f32 %v104, %v183
  %v185 = vpop.f32.mrb[0].mxu0
  %186 = vdwg.mxu0
  %v187 = vmax.f32 %v179, 0.0
  %v188 = vmax.f32 %v184, 0.0
  %vm189 = vcmask 130048
  %v191 = vsel %vm189, %v45, 0
  %v194 = vsel %vm189, %v46, 0
  %196 = vmatprep.subr.mxu0 0.0
  %197 = vmatpush1.msra.mxu0 %v187
  %198 = vmatprep.subr.mxu0 0.0
  %199 = vmatpush1.msra.mxu0 %v188
  %200 = vmatprep.subr.mxu0 0.0
  %201 = vmatpush1.msra.mxu0 0.0
  %202 = vmatprep.subr.mxu0 0.0
  %203 = vmatpush1.msra.mxu0 0.0
  %204 = vmatprep.subr.mxu0 0.0
  %205 = vmatpush1.msra.mxu0 0.0
  %206 = vmatprep.subr.mxu0 0.0
  %207 = vmatpush1.msra.mxu0 0.0
  %208 = vmatprep.subr.mxu0 0.0
  %209 = vmatpush1.msra.mxu0 0.0
  %210 = vmatprep.subr.mxu0 0.0
  %211 = vmatpush1.msra.mxu0 0.0
  %212 = vmatprep.subr.mxu0 0.0
  %213 = vmatpush1.msra.mxu0 0.0
  %214 = vmatprep.subr.mxu0 0.0
  %215 = vmatpush1.msra.mxu0 0.0
  %216 = vmatprep.subr.mxu0 0.0
  %217 = vmatpush1.msra.mxu0 0.0
  %218 = vmatprep.subr.mxu0 0.0
  %219 = vmatpush1.msra.mxu0 0.0
  %220 = vmatprep.subr.mxu0 0.0
  %221 = vmatpush1.msra.mxu0 0.0
  %222 = vmatprep.subr.mxu0 0.0
  %223 = vmatpush1.msra.mxu0 0.0
  %224 = vmatprep.subr.mxu0 0.0
  %225 = vmatpush1.msra.mxu0 0.0
  %226 = vmatprep.subr.mxu0 0.0
  %227 = vmatpush1.msra.mxu0 0.0
  %228 = vmatprep.subr.mxu0 0.0
  %229 = vmatpush1.msra.mxu0 0.0
  %230 = vmatprep.subr.mxu0 0.0
  %231 = vmatpush1.msra.mxu0 0.0
  %232 = vmatprep.subr.mxu0 0.0
  %233 = vmatpush1.msra.mxu0 0.0
  %234 = vmatprep.subr.mxu0 0.0
  %235 = vmatpush1.msra.mxu0 0.0
  %236 = vmatprep.subr.mxu0 0.0
  %237 = vmatpush1.msra.mxu0 0.0
  %238 = vmatprep.subr.mxu0 0.0
  %239 = vmatpush1.msra.mxu0 0.0
  %240 = vmatprep.subr.mxu0 0.0
  %241 = vmatpush1.msra.mxu0 0.0
  %242 = vmatprep.subr.mxu0 0.0
  %243 = vmatpush1.msra.mxu0 0.0
  %244 = vmatprep.subr.mxu0 0.0
  %245 = vmatpush1.msra.mxu0 0.0
  %246 = vmatprep.subr.mxu0 0.0
  %247 = vmatpush1.msra.mxu0 0.0
  %248 = vmatprep.subr.mxu0 0.0
  %249 = vmatpush1.msra.mxu0 0.0
  %250 = vmatprep.subr.mxu0 0.0
  %251 = vmatpush1.msra.mxu0 0.0
  %252 = vmatprep.subr.mxu0 0.0
  %253 = vmatpush1.msra.mxu0 0.0
  %254 = vmatprep.subr.mxu0 0.0
  %255 = vmatpush1.msra.mxu0 0.0
  %256 = vmatprep.subr.mxu0 0.0
  %257 = vmatpush1.msra.mxu0 0.0
  %258 = vmatprep.subr.mxu0 0.0
  %259 = vmatpush1.msra.mxu0 0.0
  %260 = vmatprep.mubr.f32.mxu0 0.0
  %261 = vmatmul.mubr.f32.gmra.mrb[0].mxu0 %v191
  %v262 = vpop.f32.mrb[0].mxu0
  %v263 = vadd.f32 0.0, %v262
  %v264 = vpop.f32.mrb[0].mxu0
  %265 = vmatprep.mubr.f32.mxu0 0.0
  %266 = vmatmul.mubr.f32.gmra.mrb[0].mxu0 %v194
  %v267 = vpop.f32.mrb[0].mxu0
  %v268 = vadd.f32 0.0, %v267
  %v269 = vpop.f32.mrb[0].mxu0
  %270 = vdwg.mxu0
  %271 = vmatprep.subr.mxu0 0.0
  %272 = vmatpush1.msra.mxu0 %v50
  %273 = vmatprep.subr.mxu0 0.0
  %274 = vmatpush1.msra.mxu0 %v51
  %275 = vmatprep.subr.mxu0 0.0
  %276 = vmatpush1.msra.mxu0 %v52
  %277 = vmatprep.subr.mxu0 0.0
  %278 = vmatpush1.msra.mxu0 %v53
  %279 = vmatprep.subr.mxu0 0.0
  %280 = vmatpush1.msra.mxu0 %v54
  %281 = vmatprep.subr.mxu0 0.0
  %282 = vmatpush1.msra.mxu0 %v55
  %283 = vmatprep.subr.mxu0 0.0
  %284 = vmatpush1.msra.mxu0 %v56
  %285 = vmatprep.subr.mxu0 0.0
  %286 = vmatpush1.msra.mxu0 %v57
  %287 = vmatprep.subr.mxu0 0.0
  %288 = vmatpush1.msra.mxu0 %v58
  %289 = vmatprep.subr.mxu0 0.0
  %290 = vmatpush1.msra.mxu0 %v59
  %291 = vmatprep.subr.mxu0 0.0
  %292 = vmatpush1.msra.mxu0 %v60
  %293 = vmatprep.subr.mxu0 0.0
  %294 = vmatpush1.msra.mxu0 %v61
  %295 = vmatprep.subr.mxu0 0.0
  %296 = vmatpush1.msra.mxu0 %v62
  %297 = vmatprep.subr.mxu0 0.0
  %298 = vmatpush1.msra.mxu0 %v63
  %299 = vmatprep.subr.mxu0 0.0
  %300 = vmatpush1.msra.mxu0 %v64
  %301 = vmatprep.subr.mxu0 0.0
  %302 = vmatpush1.msra.mxu0 %v65
  %303 = vmatprep.subr.mxu0 0.0
  %304 = vmatpush1.msra.mxu0 0.0
  %305 = vmatprep.subr.mxu0 0.0
  %306 = vmatpush1.msra.mxu0 0.0
  %307 = vmatprep.subr.mxu0 0.0
  %308 = vmatpush1.msra.mxu0 0.0
  %309 = vmatprep.subr.mxu0 0.0
  %310 = vmatpush1.msra.mxu0 0.0
  %311 = vmatprep.subr.mxu0 0.0
  %312 = vmatpush1.msra.mxu0 0.0
  %313 = vmatprep.subr.mxu0 0.0
  %314 = vmatpush1.msra.mxu0 0.0
  %315 = vmatprep.subr.mxu0 0.0
  %316 = vmatpush1.msra.mxu0 0.0
  %317 = vmatprep.subr.mxu0 0.0
  %318 = vmatpush1.msra.mxu0 0.0
  %319 = vmatprep.subr.mxu0 0.0
  %320 = vmatpush1.msra.mxu0 0.0
  %321 = vmatprep.subr.mxu0 0.0
  %322 = vmatpush1.msra.mxu0 0.0
  %323 = vmatprep.subr.mxu0 0.0
  %324 = vmatpush1.msra.mxu0 0.0
  %325 = vmatprep.subr.mxu0 0.0
  %326 = vmatpush1.msra.mxu0 0.0
  %327 = vmatprep.subr.mxu0 0.0
  %328 = vmatpush1.msra.mxu0 0.0
  %329 = vmatprep.subr.mxu0 0.0
  %330 = vmatpush1.msra.mxu0 0.0
  %331 = vmatprep.subr.mxu0 0.0
  %332 = vmatpush1.msra.mxu0 0.0
  %333 = vmatprep.subr.mxu0 0.0
  %334 = vmatpush1.msra.mxu0 0.0
  %335 = vmatprep.mubr.f32.mxu0 0.0
  %336 = vmatmul.mubr.f32.gmra.mrb[0].mxu0 %v263
  %v337 = vpop.f32.mrb[0].mxu0
  %v338 = vadd.f32 0.0, %v337
  %v339 = vpop.f32.mrb[0].mxu0
  %340 = vmatprep.mubr.f32.mxu0 0.0
  %341 = vmatmul.mubr.f32.gmra.mrb[0].mxu0 %v268
  %v342 = vpop.f32.mrb[0].mxu0
  %v343 = vadd.f32 0.0, %v342
  %v344 = vpop.f32.mrb[0].mxu0
  %345 = vdwg.mxu0
  %346 = vmatprep.subr.mxu0 0.0
  %347 = vmatpush1.msra.mxu0 %v67
  %348 = vmatprep.subr.mxu0 0.0
  %349 = vmatpush1.msra.mxu0 %v68
  %350 = vmatprep.subr.mxu0 0.0
  %351 = vmatpush1.msra.mxu0 %v69
  %352 = vmatprep.subr.mxu0 0.0
  %353 = vmatpush1.msra.mxu0 %v70
  %354 = vmatprep.subr.mxu0 0.0
  %355 = vmatpush1.msra.mxu0 %v71
  %356 = vmatprep.subr.mxu0 0.0
  %357 = vmatpush1.msra.mxu0 %v72
  %358 = vmatprep.subr.mxu0 0.0
  %359 = vmatpush1.msra.mxu0 %v73
  %360 = vmatprep.subr.mxu0 0.0
  %361 = vmatpush1.msra.mxu0 %v74
  %362 = vmatprep.subr.mxu0 0.0
  %363 = vmatpush1.msra.mxu0 %v75
  %364 = vmatprep.subr.mxu0 0.0
  %365 = vmatpush1.msra.mxu0 %v76
  %366 = vmatprep.subr.mxu0 0.0
  %367 = vmatpush1.msra.mxu0 %v77
  %368 = vmatprep.subr.mxu0 0.0
  %369 = vmatpush1.msra.mxu0 %v78
  %370 = vmatprep.subr.mxu0 0.0
  %371 = vmatpush1.msra.mxu0 %v79
  %372 = vmatprep.subr.mxu0 0.0
  %373 = vmatpush1.msra.mxu0 %v80
  %374 = vmatprep.subr.mxu0 0.0
  %375 = vmatpush1.msra.mxu0 %v81
  %376 = vmatprep.subr.mxu0 0.0
  %377 = vmatpush1.msra.mxu0 %v82
  %378 = vmatprep.subr.mxu0 0.0
  %379 = vmatpush1.msra.mxu0 0.0
  %380 = vmatprep.subr.mxu0 0.0
  %381 = vmatpush1.msra.mxu0 0.0
  %382 = vmatprep.subr.mxu0 0.0
  %383 = vmatpush1.msra.mxu0 0.0
  %384 = vmatprep.subr.mxu0 0.0
  %385 = vmatpush1.msra.mxu0 0.0
  %386 = vmatprep.subr.mxu0 0.0
  %387 = vmatpush1.msra.mxu0 0.0
  %388 = vmatprep.subr.mxu0 0.0
  %389 = vmatpush1.msra.mxu0 0.0
  %390 = vmatprep.subr.mxu0 0.0
  %391 = vmatpush1.msra.mxu0 0.0
  %392 = vmatprep.subr.mxu0 0.0
  %393 = vmatpush1.msra.mxu0 0.0
  %394 = vmatprep.subr.mxu0 0.0
  %395 = vmatpush1.msra.mxu0 0.0
  %396 = vmatprep.subr.mxu0 0.0
  %397 = vmatpush1.msra.mxu0 0.0
  %398 = vmatprep.subr.mxu0 0.0
  %399 = vmatpush1.msra.mxu0 0.0
  %400 = vmatprep.subr.mxu0 0.0
  %401 = vmatpush1.msra.mxu0 0.0
  %402 = vmatprep.subr.mxu0 0.0
  %403 = vmatpush1.msra.mxu0 0.0
  %404 = vmatprep.subr.mxu0 0.0
  %405 = vmatpush1.msra.mxu0 0.0
  %406 = vmatprep.subr.mxu0 0.0
  %407 = vmatpush1.msra.mxu0 0.0
  %408 = vmatprep.subr.mxu0 0.0
  %409 = vmatpush1.msra.mxu0 0.0
  %410 = vmatprep.mubr.f32.mxu0 0.0
  %411 = vmatmul.mubr.f32.gmra.mrb[0].mxu0 %v187
  %v412 = vpop.f32.mrb[0].mxu0
  %v413 = vadd.f32 %v338, %v412
  %v414 = vpop.f32.mrb[0].mxu0
  %415 = vmatprep.mubr.f32.mxu0 0.0
  %416 = vmatmul.mubr.f32.gmra.mrb[0].mxu0 %v188
  %v417 = vpop.f32.mrb[0].mxu0
  %v418 = vadd.f32 %v343, %v417
  %v419 = vpop.f32.mrb[0].mxu0
  %420 = vdwg.mxu0
  %v422 = vsel %vm189, %v48, 0
  %v425 = vsel %vm189, %v49, 0
  %427 = vmatprep.subr.mxu0 0.0
  %428 = vmatpush1.msra.mxu0 %v187
  %429 = vmatprep.subr.mxu0 0.0
  %430 = vmatpush1.msra.mxu0 %v188
  %431 = vmatprep.subr.mxu0 0.0
  %432 = vmatpush1.msra.mxu0 0.0
  %433 = vmatprep.subr.mxu0 0.0
  %434 = vmatpush1.msra.mxu0 0.0
  %435 = vmatprep.subr.mxu0 0.0
  %436 = vmatpush1.msra.mxu0 0.0
  %437 = vmatprep.subr.mxu0 0.0
  %438 = vmatpush1.msra.mxu0 0.0
  %439 = vmatprep.subr.mxu0 0.0
  %440 = vmatpush1.msra.mxu0 0.0
  %441 = vmatprep.subr.mxu0 0.0
  %442 = vmatpush1.msra.mxu0 0.0
  %443 = vmatprep.subr.mxu0 0.0
  %444 = vmatpush1.msra.mxu0 0.0
  %445 = vmatprep.subr.mxu0 0.0
  %446 = vmatpush1.msra.mxu0 0.0
  %447 = vmatprep.subr.mxu0 0.0
  %448 = vmatpush1.msra.mxu0 0.0
  %449 = vmatprep.subr.mxu0 0.0
  %450 = vmatpush1.msra.mxu0 0.0
  %451 = vmatprep.subr.mxu0 0.0
  %452 = vmatpush1.msra.mxu0 0.0
  %453 = vmatprep.subr.mxu0 0.0
  %454 = vmatpush1.msra.mxu0 0.0
  %455 = vmatprep.subr.mxu0 0.0
  %456 = vmatpush1.msra.mxu0 0.0
  %457 = vmatprep.subr.mxu0 0.0
  %458 = vmatpush1.msra.mxu0 0.0
  %459 = vmatprep.subr.mxu0 0.0
  %460 = vmatpush1.msra.mxu0 0.0
  %461 = vmatprep.subr.mxu0 0.0
  %462 = vmatpush1.msra.mxu0 0.0
  %463 = vmatprep.subr.mxu0 0.0
  %464 = vmatpush1.msra.mxu0 0.0
  %465 = vmatprep.subr.mxu0 0.0
  %466 = vmatpush1.msra.mxu0 0.0
  %467 = vmatprep.subr.mxu0 0.0
  %468 = vmatpush1.msra.mxu0 0.0
  %469 = vmatprep.subr.mxu0 0.0
  %470 = vmatpush1.msra.mxu0 0.0
  %471 = vmatprep.subr.mxu0 0.0
  %472 = vmatpush1.msra.mxu0 0.0
  %473 = vmatprep.subr.mxu0 0.0
  %474 = vmatpush1.msra.mxu0 0.0
  %475 = vmatprep.subr.mxu0 0.0
  %476 = vmatpush1.msra.mxu0 0.0
  %477 = vmatprep.subr.mxu0 0.0
  %478 = vmatpush1.msra.mxu0 0.0
  %479 = vmatprep.subr.mxu0 0.0
  %480 = vmatpush1.msra.mxu0 0.0
  %481 = vmatprep.subr.mxu0 0.0
  %482 = vmatpush1.msra.mxu0 0.0
  %483 = vmatprep.subr.mxu0 0.0
  %484 = vmatpush1.msra.mxu0 0.0
  %485 = vmatprep.subr.mxu0 0.0
  %486 = vmatpush1.msra.mxu0 0.0
  %487 = vmatprep.subr.mxu0 0.0
  %488 = vmatpush1.msra.mxu0 0.0
  %489 = vmatprep.subr.mxu0 0.0
  %490 = vmatpush1.msra.mxu0 0.0
  %491 = vmatprep.mubr.f32.mxu0 0.0
  %492 = vmatmul.mubr.f32.gmra.mrb[0].mxu0 %v422
  %v493 = vpop.f32.mrb[0].mxu0
  %v494 = vadd.f32 0.0, %v493
  %v495 = vpop.f32.mrb[0].mxu0
  %496 = vmatprep.mubr.f32.mxu0 0.0
  %497 = vmatmul.mubr.f32.gmra.mrb[0].mxu0 %v425
  %v498 = vpop.f32.mrb[0].mxu0
  %v499 = vadd.f32 0.0, %v498
  %v500 = vpop.f32.mrb[0].mxu0
  %501 = vdwg.mxu0
  %502 = vmatprep.subr.mxu0 0.0
  %503 = vmatpush1.msra.mxu0 %v84
  %504 = vmatprep.subr.mxu0 0.0
  %505 = vmatpush1.msra.mxu0 %v85
  %506 = vmatprep.subr.mxu0 0.0
  %507 = vmatpush1.msra.mxu0 %v86
  %508 = vmatprep.subr.mxu0 0.0
  %509 = vmatpush1.msra.mxu0 %v87
  %510 = vmatprep.subr.mxu0 0.0
  %511 = vmatpush1.msra.mxu0 %v88
  %512 = vmatprep.subr.mxu0 0.0
  %513 = vmatpush1.msra.mxu0 %v89
  %514 = vmatprep.subr.mxu0 0.0
  %515 = vmatpush1.msra.mxu0 %v90
  %516 = vmatprep.subr.mxu0 0.0
  %517 = vmatpush1.msra.mxu0 %v91
  %518 = vmatprep.subr.mxu0 0.0
  %519 = vmatpush1.msra.mxu0 %v92
  %520 = vmatprep.subr.mxu0 0.0
  %521 = vmatpush1.msra.mxu0 %v93
  %522 = vmatprep.subr.mxu0 0.0
  %523 = vmatpush1.msra.mxu0 %v94
  %524 = vmatprep.subr.mxu0 0.0
  %525 = vmatpush1.msra.mxu0 %v95
  %526 = vmatprep.subr.mxu0 0.0
  %527 = vmatpush1.msra.mxu0 %v96
  %528 = vmatprep.subr.mxu0 0.0
  %529 = vmatpush1.msra.mxu0 %v97
  %530 = vmatprep.subr.mxu0 0.0
  %531 = vmatpush1.msra.mxu0 %v98
  %532 = vmatprep.subr.mxu0 0.0
  %533 = vmatpush1.msra.mxu0 %v99
  %534 = vmatprep.subr.mxu0 0.0
  %535 = vmatpush1.msra.mxu0 0.0
  %536 = vmatprep.subr.mxu0 0.0
  %537 = vmatpush1.msra.mxu0 0.0
  %538 = vmatprep.subr.mxu0 0.0
  %539 = vmatpush1.msra.mxu0 0.0
  %540 = vmatprep.subr.mxu0 0.0
  %541 = vmatpush1.msra.mxu0 0.0
  %542 = vmatprep.subr.mxu0 0.0
  %543 = vmatpush1.msra.mxu0 0.0
  %544 = vmatprep.subr.mxu0 0.0
  %545 = vmatpush1.msra.mxu0 0.0
  %546 = vmatprep.subr.mxu0 0.0
  %547 = vmatpush1.msra.mxu0 0.0
  %548 = vmatprep.subr.mxu0 0.0
  %549 = vmatpush1.msra.mxu0 0.0
  %550 = vmatprep.subr.mxu0 0.0
  %551 = vmatpush1.msra.mxu0 0.0
  %552 = vmatprep.subr.mxu0 0.0
  %553 = vmatpush1.msra.mxu0 0.0
  %554 = vmatprep.subr.mxu0 0.0
  %555 = vmatpush1.msra.mxu0 0.0
  %556 = vmatprep.subr.mxu0 0.0
  %557 = vmatpush1.msra.mxu0 0.0
  %558 = vmatprep.subr.mxu0 0.0
  %559 = vmatpush1.msra.mxu0 0.0
  %560 = vmatprep.subr.mxu0 0.0
  %561 = vmatpush1.msra.mxu0 0.0
  %562 = vmatprep.subr.mxu0 0.0
  %563 = vmatpush1.msra.mxu0 0.0
  %564 = vmatprep.subr.mxu0 0.0
  %565 = vmatpush1.msra.mxu0 0.0
  %566 = vmatprep.mubr.f32.mxu0 0.0
  %567 = vmatmul.mubr.f32.gmra.mrb[0].mxu0 %v494
  %v568 = vpop.f32.mrb[0].mxu0
  %v569 = vadd.f32 0.0, %v568
  %v570 = vpop.f32.mrb[0].mxu0
  %571 = vmatprep.mubr.f32.mxu0 0.0
  %572 = vmatmul.mubr.f32.gmra.mrb[0].mxu0 %v499
  %v573 = vpop.f32.mrb[0].mxu0
  %v574 = vadd.f32 0.0, %v573
  %v575 = vpop.f32.mrb[0].mxu0
  %576 = vdwg.mxu0
  %v577 = vadd.f32 %v413, %v569
  %v578 = vadd.f32 %v418, %v574
  %v579 = vlaneseq
  %v580 = vshrl.u32 %v579, 7
  %v581 = vsub.s32 0, %v580
  %v582 = vrot.slane %v100, %v581
  %v583 = vadd.f32 %v577, %v582
  %v584 = vadd.f32 %v578, %v582
  %v585 = vmax.f32 %v583, 0.0
  %v586 = vmax.f32 %v584, 0.0
  %v587 = vrot.slane %v585, 4
  %v588 = vmax.f32 %v585, %v587
  %v589 = vrot.slane %v588, 2
  %v590 = vmax.f32 %v588, %v589
  %v591 = vrot.slane %v590, 1
  %v592 = vmax.f32 %v590, %v591
  %v593 = vrot.slane %v586, 4
  %v594 = vmax.f32 %v586, %v593
  %v595 = vrot.slane %v594, 2
  %v596 = vmax.f32 %v594, %v595
  %v597 = vrot.slane %v596, 1
  %v598 = vmax.f32 %v596, %v597
  %601 = vrot.lane.b32.xlu0 %v592, 112
  %v602 = vpop.permute.xlu0 %601
  %603 = vrot.lane.b32.xlu0 %v598, 112
  %v604 = vpop.permute.xlu0 %603
  %v607 = vmax.f32 %v592, %v602
  %v608 = vmax.f32 %v598, %v604
  %609 = vrot.lane.b32.xlu0 %v592, 96
  %v610 = vpop.permute.xlu0 %609
  %611 = vrot.lane.b32.xlu0 %v598, 96
  %v612 = vpop.permute.xlu0 %611
  %v615 = vmax.f32 %v607, %v610
  %v616 = vmax.f32 %v608, %v612
  %617 = vrot.lane.b32.xlu0 %v592, 80
  %v618 = vpop.permute.xlu0 %617
  %619 = vrot.lane.b32.xlu0 %v598, 80
  %v620 = vpop.permute.xlu0 %619
  %v623 = vmax.f32 %v615, %v618
  %v624 = vmax.f32 %v616, %v620
  %625 = vrot.lane.b32.xlu0 %v592, 64
  %v626 = vpop.permute.xlu0 %625
  %627 = vrot.lane.b32.xlu0 %v598, 64
  %v628 = vpop.permute.xlu0 %627
  %v631 = vmax.f32 %v623, %v626
  %v632 = vmax.f32 %v624, %v628
  %633 = vrot.lane.b32.xlu0 %v592, 48
  %v634 = vpop.permute.xlu0 %633
  %635 = vrot.lane.b32.xlu0 %v598, 48
  %v636 = vpop.permute.xlu0 %635
  %v639 = vmax.f32 %v631, %v634
  %v640 = vmax.f32 %v632, %v636
  %641 = vrot.lane.b32.xlu0 %v592, 32
  %v642 = vpop.permute.xlu0 %641
  %643 = vrot.lane.b32.xlu0 %v598, 32
  %v644 = vpop.permute.xlu0 %643
  %v647 = vmax.f32 %v639, %v642
  %v648 = vmax.f32 %v640, %v644
  %649 = vrot.lane.b32.xlu0 %v592, 16
  %v650 = vpop.permute.xlu0 %649
  %651 = vrot.lane.b32.xlu0 %v598, 16
  %v652 = vpop.permute.xlu0 %651
  %v655 = vmax.f32 %v647, %v650
  %v656 = vmax.f32 %v648, %v652
  %v657 = vld [vmem:[%s1] sm:$0xff]
  %v658 = vld [vmem:[%s1 + $0x8] sm:$0xff]
  %s659 = scalar_lea.vmem %s3, 128
  %v660 = vld [vmem:[%s659] sm:$0xff]
  %v661 = vld [vmem:[%s659 + $0x8] sm:$0xff]
  %v662 = vld [vmem:[%s659 + $0x10] sm:$0xff]
  %v663 = vld [vmem:[%s659 + $0x18] sm:$0xff]
  %v664 = vld [vmem:[%s659 + $0x20] sm:$0xff]
  %v665 = vld [vmem:[%s659 + $0x28] sm:$0xff]
  %v666 = vld [vmem:[%s659 + $0x30] sm:$0xff]
  %v667 = vld [vmem:[%s659 + $0x38] sm:$0xff]
  %v668 = vld [vmem:[%s6 + $0x1] sm:$0x1]
  %s669 = scalar_lea.vmem %s5, 32
  %v670 = vld [vmem:[%s669] sm:$0xff]
  %v671 = vld [vmem:[%s669 + $0x8] sm:$0xff]
  %s672 = scalar_lea.vmem %s5, 48
  %v673 = vld [vmem:[%s672] sm:$0xff]
  %v674 = vld [vmem:[%s672 + $0x8] sm:$0xff]
  %s675 = scalar_lea.vmem %s4, 384
  %v676 = vld [vmem:[%s675] sm:$0xff]
  %v677 = vld [vmem:[%s675 + $0x8] sm:$0xff]
  %v678 = vld [vmem:[%s675 + $0x10] sm:$0xff]
  %v679 = vld [vmem:[%s675 + $0x18] sm:$0xff]
  %v680 = vld [vmem:[%s675 + $0x20] sm:$0xff]
  %v681 = vld [vmem:[%s675 + $0x28] sm:$0xff]
  %v682 = vld [vmem:[%s675 + $0x30] sm:$0xff]
  %v683 = vld [vmem:[%s675 + $0x38] sm:$0xff]
  %v684 = vld [vmem:[%s675 + $0x40] sm:$0xff]
  %v685 = vld [vmem:[%s675 + $0x48] sm:$0xff]
  %v686 = vld [vmem:[%s675 + $0x50] sm:$0xff]
  %v687 = vld [vmem:[%s675 + $0x58] sm:$0xff]
  %v688 = vld [vmem:[%s675 + $0x60] sm:$0xff]
  %v689 = vld [vmem:[%s675 + $0x68] sm:$0xff]
  %v690 = vld [vmem:[%s675 + $0x70] sm:$0xff]
  %v691 = vld [vmem:[%s675 + $0x78] sm:$0xff]
  %s692 = scalar_lea.vmem %s4, 512
  %v693 = vld [vmem:[%s692] sm:$0xff]
  %v694 = vld [vmem:[%s692 + $0x8] sm:$0xff]
  %v695 = vld [vmem:[%s692 + $0x10] sm:$0xff]
  %v696 = vld [vmem:[%s692 + $0x18] sm:$0xff]
  %v697 = vld [vmem:[%s692 + $0x20] sm:$0xff]
  %v698 = vld [vmem:[%s692 + $0x28] sm:$0xff]
  %v699 = vld [vmem:[%s692 + $0x30] sm:$0xff]
  %v700 = vld [vmem:[%s692 + $0x38] sm:$0xff]
  %v701 = vld [vmem:[%s692 + $0x40] sm:$0xff]
  %v702 = vld [vmem:[%s692 + $0x48] sm:$0xff]
  %v703 = vld [vmem:[%s692 + $0x50] sm:$0xff]
  %v704 = vld [vmem:[%s692 + $0x58] sm:$0xff]
  %v705 = vld [vmem:[%s692 + $0x60] sm:$0xff]
  %v706 = vld [vmem:[%s692 + $0x68] sm:$0xff]
  %v707 = vld [vmem:[%s692 + $0x70] sm:$0xff]
  %v708 = vld [vmem:[%s692 + $0x78] sm:$0xff]
  %s709 = scalar_lea.vmem %s4, 640
  %v710 = vld [vmem:[%s709] sm:$0xff]
  %v711 = vld [vmem:[%s709 + $0x8] sm:$0xff]
  %v712 = vld [vmem:[%s709 + $0x10] sm:$0xff]
  %v713 = vld [vmem:[%s709 + $0x18] sm:$0xff]
  %v714 = vld [vmem:[%s709 + $0x20] sm:$0xff]
  %v715 = vld [vmem:[%s709 + $0x28] sm:$0xff]
  %v716 = vld [vmem:[%s709 + $0x30] sm:$0xff]
  %v717 = vld [vmem:[%s709 + $0x38] sm:$0xff]
  %v718 = vld [vmem:[%s709 + $0x40] sm:$0xff]
  %v719 = vld [vmem:[%s709 + $0x48] sm:$0xff]
  %v720 = vld [vmem:[%s709 + $0x50] sm:$0xff]
  %v721 = vld [vmem:[%s709 + $0x58] sm:$0xff]
  %v722 = vld [vmem:[%s709 + $0x60] sm:$0xff]
  %v723 = vld [vmem:[%s709 + $0x68] sm:$0xff]
  %v724 = vld [vmem:[%s709 + $0x70] sm:$0xff]
  %v725 = vld [vmem:[%s709 + $0x78] sm:$0xff]
  %v726 = vld [vmem:[%s6 + $0x4] sm:$0x1]
  %v727 = vlaneseq
  %v728 = vshrl.u32 %v727, 7
  %v729 = vsub.s32 0, %v728
  %v730 = vrot.slane %v668, %v729
  %v732 = vsel %vm105, %v657, 0
  %v735 = vsel %vm105, %v658, 0
  %737 = vmatprep.subr.mxu0 0.0
  %738 = vmatpush1.msra.mxu0 %v660
  %739 = vmatprep.subr.mxu0 0.0
  %740 = vmatpush1.msra.mxu0 %v661
  %741 = vmatprep.subr.mxu0 0.0
  %742 = vmatpush1.msra.mxu0 %v662
  %743 = vmatprep.subr.mxu0 0.0
  %744 = vmatpush1.msra.mxu0 %v663
  %745 = vmatprep.subr.mxu0 0.0
  %746 = vmatpush1.msra.mxu0 %v664
  %747 = vmatprep.subr.mxu0 0.0
  %748 = vmatpush1.msra.mxu0 %v665
  %749 = vmatprep.subr.mxu0 0.0
  %750 = vmatpush1.msra.mxu0 %v666
  %751 = vmatprep.subr.mxu0 0.0
  %752 = vmatpush1.msra.mxu0 %v667
  %753 = vmatprep.subr.mxu0 0.0
  %754 = vmatpush1.msra.mxu0 0.0
  %755 = vmatprep.subr.mxu0 0.0
  %756 = vmatpush1.msra.mxu0 0.0
  %757 = vmatprep.subr.mxu0 0.0
  %758 = vmatpush1.msra.mxu0 0.0
  %759 = vmatprep.subr.mxu0 0.0
  %760 = vmatpush1.msra.mxu0 0.0
  %761 = vmatprep.subr.mxu0 0.0
  %762 = vmatpush1.msra.mxu0 0.0
  %763 = vmatprep.subr.mxu0 0.0
  %764 = vmatpush1.msra.mxu0 0.0
  %765 = vmatprep.subr.mxu0 0.0
  %766 = vmatpush1.msra.mxu0 0.0
  %767 = vmatprep.subr.mxu0 0.0
  %768 = vmatpush1.msra.mxu0 0.0
  %769 = vmatprep.subr.mxu0 0.0
  %770 = vmatpush1.msra.mxu0 0.0
  %771 = vmatprep.subr.mxu0 0.0
  %772 = vmatpush1.msra.mxu0 0.0
  %773 = vmatprep.subr.mxu0 0.0
  %774 = vmatpush1.msra.mxu0 0.0
  %775 = vmatprep.subr.mxu0 0.0
  %776 = vmatpush1.msra.mxu0 0.0
  %777 = vmatprep.subr.mxu0 0.0
  %778 = vmatpush1.msra.mxu0 0.0
  %779 = vmatprep.subr.mxu0 0.0
  %780 = vmatpush1.msra.mxu0 0.0
  %781 = vmatprep.subr.mxu0 0.0
  %782 = vmatpush1.msra.mxu0 0.0
  %783 = vmatprep.subr.mxu0 0.0
  %784 = vmatpush1.msra.mxu0 0.0
  %785 = vmatprep.subr.mxu0 0.0
  %786 = vmatpush1.msra.mxu0 0.0
  %787 = vmatprep.subr.mxu0 0.0
  %788 = vmatpush1.msra.mxu0 0.0
  %789 = vmatprep.subr.mxu0 0.0
  %790 = vmatpush1.msra.mxu0 0.0
  %791 = vmatprep.subr.mxu0 0.0
  %792 = vmatpush1.msra.mxu0 0.0
  %793 = vmatprep.subr.mxu0 0.0
  %794 = vmatpush1.msra.mxu0 0.0
  %795 = vmatprep.subr.mxu0 0.0
  %796 = vmatpush1.msra.mxu0 0.0
  %797 = vmatprep.subr.mxu0 0.0
  %798 = vmatpush1.msra.mxu0 0.0
  %799 = vmatprep.subr.mxu0 0.0
  %800 = vmatpush1.msra.mxu0 0.0
  %801 = vmatprep.mubr.f32.mxu0 0.0
  %802 = vmatmul.mubr.f32.gmra.mrb[0].mxu0 %v732
  %v803 = vpop.f32.mrb[0].mxu0
  %v804 = vadd.f32 %v730, %v803
  %v805 = vpop.f32.mrb[0].mxu0
  %806 = vmatprep.mubr.f32.mxu0 0.0
  %807 = vmatmul.mubr.f32.gmra.mrb[0].mxu0 %v735
  %v808 = vpop.f32.mrb[0].mxu0
  %v809 = vadd.f32 %v730, %v808
  %v810 = vpop.f32.mrb[0].mxu0
  %811 = vdwg.mxu0
  %v812 = vmax.f32 %v804, 0.0
  %v813 = vmax.f32 %v809, 0.0
  %v815 = vsel %vm189, %v670, 0
  %v818 = vsel %vm189, %v671, 0
  %820 = vmatprep.subr.mxu0 0.0
  %821 = vmatpush1.msra.mxu0 %v812
  %822 = vmatprep.subr.mxu0 0.0
  %823 = vmatpush1.msra.mxu0 %v813
  %824 = vmatprep.subr.mxu0 0.0
  %825 = vmatpush1.msra.mxu0 0.0
  %826 = vmatprep.subr.mxu0 0.0
  %827 = vmatpush1.msra.mxu0 0.0
  %828 = vmatprep.subr.mxu0 0.0
  %829 = vmatpush1.msra.mxu0 0.0
  %830 = vmatprep.subr.mxu0 0.0
  %831 = vmatpush1.msra.mxu0 0.0
  %832 = vmatprep.subr.mxu0 0.0
  %833 = vmatpush1.msra.mxu0 0.0
  %834 = vmatprep.subr.mxu0 0.0
  %835 = vmatpush1.msra.mxu0 0.0
  %836 = vmatprep.subr.mxu0 0.0
  %837 = vmatpush1.msra.mxu0 0.0
  %838 = vmatprep.subr.mxu0 0.0
  %839 = vmatpush1.msra.mxu0 0.0
  %840 = vmatprep.subr.mxu0 0.0
  %841 = vmatpush1.msra.mxu0 0.0
  %842 = vmatprep.subr.mxu0 0.0
  %843 = vmatpush1.msra.mxu0 0.0
  %844 = vmatprep.subr.mxu0 0.0
  %845 = vmatpush1.msra.mxu0 0.0
  %846 = vmatprep.subr.mxu0 0.0
  %847 = vmatpush1.msra.mxu0 0.0
  %848 = vmatprep.subr.mxu0 0.0
  %849 = vmatpush1.msra.mxu0 0.0
  %850 = vmatprep.subr.mxu0 0.0
  %851 = vmatpush1.msra.mxu0 0.0
  %852 = vmatprep.subr.mxu0 0.0
  %853 = vmatpush1.msra.mxu0 0.0
  %854 = vmatprep.subr.mxu0 0.0
  %855 = vmatpush1.msra.mxu0 0.0
  %856 = vmatprep.subr.mxu0 0.0
  %857 = vmatpush1.msra.mxu0 0.0
  %858 = vmatprep.subr.mxu0 0.0
  %859 = vmatpush1.msra.mxu0 0.0
  %860 = vmatprep.subr.mxu0 0.0
  %861 = vmatpush1.msra.mxu0 0.0
  %862 = vmatprep.subr.mxu0 0.0
  %863 = vmatpush1.msra.mxu0 0.0
  %864 = vmatprep.subr.mxu0 0.0
  %865 = vmatpush1.msra.mxu0 0.0
  %866 = vmatprep.subr.mxu0 0.0
  %867 = vmatpush1.msra.mxu0 0.0
  %868 = vmatprep.subr.mxu0 0.0
  %869 = vmatpush1.msra.mxu0 0.0
  %870 = vmatprep.subr.mxu0 0.0
  %871 = vmatpush1.msra.mxu0 0.0
  %872 = vmatprep.subr.mxu0 0.0
  %873 = vmatpush1.msra.mxu0 0.0
  %874 = vmatprep.subr.mxu0 0.0
  %875 = vmatpush1.msra.mxu0 0.0
  %876 = vmatprep.subr.mxu0 0.0
  %877 = vmatpush1.msra.mxu0 0.0
  %878 = vmatprep.subr.mxu0 0.0
  %879 = vmatpush1.msra.mxu0 0.0
  %880 = vmatprep.subr.mxu0 0.0
  %881 = vmatpush1.msra.mxu0 0.0
  %882 = vmatprep.subr.mxu0 0.0
  %883 = vmatpush1.msra.mxu0 0.0
  %884 = vmatprep.mubr.f32.mxu0 0.0
  %885 = vmatmul.mubr.f32.gmra.mrb[0].mxu0 %v815
  %v886 = vpop.f32.mrb[0].mxu0
  %v887 = vadd.f32 0.0, %v886
  %v888 = vpop.f32.mrb[0].mxu0
  %889 = vmatprep.mubr.f32.mxu0 0.0
  %890 = vmatmul.mubr.f32.gmra.mrb[0].mxu0 %v818
  %v891 = vpop.f32.mrb[0].mxu0
  %v892 = vadd.f32 0.0, %v891
  %v893 = vpop.f32.mrb[0].mxu0
  %894 = vdwg.mxu0
  %895 = vmatprep.subr.mxu0 0.0
  %896 = vmatpush1.msra.mxu0 %v676
  %897 = vmatprep.subr.mxu0 0.0
  %898 = vmatpush1.msra.mxu0 %v677
  %899 = vmatprep.subr.mxu0 0.0
  %900 = vmatpush1.msra.mxu0 %v678
  %901 = vmatprep.subr.mxu0 0.0
  %902 = vmatpush1.msra.mxu0 %v679
  %903 = vmatprep.subr.mxu0 0.0
  %904 = vmatpush1.msra.mxu0 %v680
  %905 = vmatprep.subr.mxu0 0.0
  %906 = vmatpush1.msra.mxu0 %v681
  %907 = vmatprep.subr.mxu0 0.0
  %908 = vmatpush1.msra.mxu0 %v682
  %909 = vmatprep.subr.mxu0 0.0
  %910 = vmatpush1.msra.mxu0 %v683
  %911 = vmatprep.subr.mxu0 0.0
  %912 = vmatpush1.msra.mxu0 %v684
  %913 = vmatprep.subr.mxu0 0.0
  %914 = vmatpush1.msra.mxu0 %v685
  %915 = vmatprep.subr.mxu0 0.0
  %916 = vmatpush1.msra.mxu0 %v686
  %917 = vmatprep.subr.mxu0 0.0
  %918 = vmatpush1.msra.mxu0 %v687
  %919 = vmatprep.subr.mxu0 0.0
  %920 = vmatpush1.msra.mxu0 %v688
  %921 = vmatprep.subr.mxu0 0.0
  %922 = vmatpush1.msra.mxu0 %v689
  %923 = vmatprep.subr.mxu0 0.0
  %924 = vmatpush1.msra.mxu0 %v690
  %925 = vmatprep.subr.mxu0 0.0
  %926 = vmatpush1.msra.mxu0 %v691
  %927 = vmatprep.subr.mxu0 0.0
  %928 = vmatpush1.msra.mxu0 0.0
  %929 = vmatprep.subr.mxu0 0.0
  %930 = vmatpush1.msra.mxu0 0.0
  %931 = vmatprep.subr.mxu0 0.0
  %932 = vmatpush1.msra.mxu0 0.0
  %933 = vmatprep.subr.mxu0 0.0
  %934 = vmatpush1.msra.mxu0 0.0
  %935 = vmatprep.subr.mxu0 0.0
  %936 = vmatpush1.msra.mxu0 0.0
  %937 = vmatprep.subr.mxu0 0.0
  %938 = vmatpush1.msra.mxu0 0.0
  %939 = vmatprep.subr.mxu0 0.0
  %940 = vmatpush1.msra.mxu0 0.0
  %941 = vmatprep.subr.mxu0 0.0
  %942 = vmatpush1.msra.mxu0 0.0
  %943 = vmatprep.subr.mxu0 0.0
  %944 = vmatpush1.msra.mxu0 0.0
  %945 = vmatprep.subr.mxu0 0.0
  %946 = vmatpush1.msra.mxu0 0.0
  %947 = vmatprep.subr.mxu0 0.0
  %948 = vmatpush1.msra.mxu0 0.0
  %949 = vmatprep.subr.mxu0 0.0
  %950 = vmatpush1.msra.mxu0 0.0
  %951 = vmatprep.subr.mxu0 0.0
  %952 = vmatpush1.msra.mxu0 0.0
  %953 = vmatprep.subr.mxu0 0.0
  %954 = vmatpush1.msra.mxu0 0.0
  %955 = vmatprep.subr.mxu0 0.0
  %956 = vmatpush1.msra.mxu0 0.0
  %957 = vmatprep.subr.mxu0 0.0
  %958 = vmatpush1.msra.mxu0 0.0
  %959 = vmatprep.mubr.f32.mxu0 0.0
  %960 = vmatmul.mubr.f32.gmra.mrb[0].mxu0 %v887
  %v961 = vpop.f32.mrb[0].mxu0
  %v962 = vadd.f32 0.0, %v961
  %v963 = vpop.f32.mrb[0].mxu0
  %964 = vmatprep.mubr.f32.mxu0 0.0
  %965 = vmatmul.mubr.f32.gmra.mrb[0].mxu0 %v892
  %v966 = vpop.f32.mrb[0].mxu0
  %v967 = vadd.f32 0.0, %v966
  %v968 = vpop.f32.mrb[0].mxu0
  %969 = vdwg.mxu0
  %970 = vmatprep.subr.mxu0 0.0
  %971 = vmatpush1.msra.mxu0 %v693
  %972 = vmatprep.subr.mxu0 0.0
  %973 = vmatpush1.msra.mxu0 %v694
  %974 = vmatprep.subr.mxu0 0.0
  %975 = vmatpush1.msra.mxu0 %v695
  %976 = vmatprep.subr.mxu0 0.0
  %977 = vmatpush1.msra.mxu0 %v696
  %978 = vmatprep.subr.mxu0 0.0
  %979 = vmatpush1.msra.mxu0 %v697
  %980 = vmatprep.subr.mxu0 0.0
  %981 = vmatpush1.msra.mxu0 %v698
  %982 = vmatprep.subr.mxu0 0.0
  %983 = vmatpush1.msra.mxu0 %v699
  %984 = vmatprep.subr.mxu0 0.0
  %985 = vmatpush1.msra.mxu0 %v700
  %986 = vmatprep.subr.mxu0 0.0
  %987 = vmatpush1.msra.mxu0 %v701
  %988 = vmatprep.subr.mxu0 0.0
  %989 = vmatpush1.msra.mxu0 %v702
  %990 = vmatprep.subr.mxu0 0.0
  %991 = vmatpush1.msra.mxu0 %v703
  %992 = vmatprep.subr.mxu0 0.0
  %993 = vmatpush1.msra.mxu0 %v704
  %994 = vmatprep.subr.mxu0 0.0
  %995 = vmatpush1.msra.mxu0 %v705
  %996 = vmatprep.subr.mxu0 0.0
  %997 = vmatpush1.msra.mxu0 %v706
  %998 = vmatprep.subr.mxu0 0.0
  %999 = vmatpush1.msra.mxu0 %v707
  %1000 = vmatprep.subr.mxu0 0.0
  %1001 = vmatpush1.msra.mxu0 %v708
  %1002 = vmatprep.subr.mxu0 0.0
  %1003 = vmatpush1.msra.mxu0 0.0
  %1004 = vmatprep.subr.mxu0 0.0
  %1005 = vmatpush1.msra.mxu0 0.0
  %1006 = vmatprep.subr.mxu0 0.0
  %1007 = vmatpush1.msra.mxu0 0.0
  %1008 = vmatprep.subr.mxu0 0.0
  %1009 = vmatpush1.msra.mxu0 0.0
  %1010 = vmatprep.subr.mxu0 0.0
  %1011 = vmatpush1.msra.mxu0 0.0
  %1012 = vmatprep.subr.mxu0 0.0
  %1013 = vmatpush1.msra.mxu0 0.0
  %1014 = vmatprep.subr.mxu0 0.0
  %1015 = vmatpush1.msra.mxu0 0.0
  %1016 = vmatprep.subr.mxu0 0.0
  %1017 = vmatpush1.msra.mxu0 0.0
  %1018 = vmatprep.subr.mxu0 0.0
  %1019 = vmatpush1.msra.mxu0 0.0
  %1020 = vmatprep.subr.mxu0 0.0
  %1021 = vmatpush1.msra.mxu0 0.0
  %1022 = vmatprep.subr.mxu0 0.0
  %1023 = vmatpush1.msra.mxu0 0.0
  %1024 = vmatprep.subr.mxu0 0.0
  %1025 = vmatpush1.msra.mxu0 0.0
  %1026 = vmatprep.subr.mxu0 0.0
  %1027 = vmatpush1.msra.mxu0 0.0
  %1028 = vmatprep.subr.mxu0 0.0
  %1029 = vmatpush1.msra.mxu0 0.0
  %1030 = vmatprep.subr.mxu0 0.0
  %1031 = vmatpush1.msra.mxu0 0.0
  %1032 = vmatprep.subr.mxu0 0.0
  %1033 = vmatpush1.msra.mxu0 0.0
  %1034 = vmatprep.mubr.f32.mxu0 0.0
  %1035 = vmatmul.mubr.f32.gmra.mrb[0].mxu0 %v812
  %v1036 = vpop.f32.mrb[0].mxu0
  %v1037 = vadd.f32 %v962, %v1036
  %v1038 = vpop.f32.mrb[0].mxu0
  %1039 = vmatprep.mubr.f32.mxu0 0.0
  %1040 = vmatmul.mubr.f32.gmra.mrb[0].mxu0 %v813
  %v1041 = vpop.f32.mrb[0].mxu0
  %v1042 = vadd.f32 %v967, %v1041
  %v1043 = vpop.f32.mrb[0].mxu0
  %1044 = vdwg.mxu0
  %v1046 = vsel %vm189, %v673, 0
  %v1049 = vsel %vm189, %v674, 0
  %1051 = vmatprep.subr.mxu0 0.0
  %1052 = vmatpush1.msra.mxu0 %v812
  %1053 = vmatprep.subr.mxu0 0.0
  %1054 = vmatpush1.msra.mxu0 %v813
  %1055 = vmatprep.subr.mxu0 0.0
  %1056 = vmatpush1.msra.mxu0 0.0
  %1057 = vmatprep.subr.mxu0 0.0
  %1058 = vmatpush1.msra.mxu0 0.0
  %1059 = vmatprep.subr.mxu0 0.0
  %1060 = vmatpush1.msra.mxu0 0.0
  %1061 = vmatprep.subr.mxu0 0.0
  %1062 = vmatpush1.msra.mxu0 0.0
  %1063 = vmatprep.subr.mxu0 0.0
  %1064 = vmatpush1.msra.mxu0 0.0
  %1065 = vmatprep.subr.mxu0 0.0
  %1066 = vmatpush1.msra.mxu0 0.0
  %1067 = vmatprep.subr.mxu0 0.0
  %1068 = vmatpush1.msra.mxu0 0.0
  %1069 = vmatprep.subr.mxu0 0.0
  %1070 = vmatpush1.msra.mxu0 0.0
  %1071 = vmatprep.subr.mxu0 0.0
  %1072 = vmatpush1.msra.mxu0 0.0
  %1073 = vmatprep.subr.mxu0 0.0
  %1074 = vmatpush1.msra.mxu0 0.0
  %1075 = vmatprep.subr.mxu0 0.0
  %1076 = vmatpush1.msra.mxu0 0.0
  %1077 = vmatprep.subr.mxu0 0.0
  %1078 = vmatpush1.msra.mxu0 0.0
  %1079 = vmatprep.subr.mxu0 0.0
  %1080 = vmatpush1.msra.mxu0 0.0
  %1081 = vmatprep.subr.mxu0 0.0
  %1082 = vmatpush1.msra.mxu0 0.0
  %1083 = vmatprep.subr.mxu0 0.0
  %1084 = vmatpush1.msra.mxu0 0.0
  %1085 = vmatprep.subr.mxu0 0.0
  %1086 = vmatpush1.msra.mxu0 0.0
  %1087 = vmatprep.subr.mxu0 0.0
  %1088 = vmatpush1.msra.mxu0 0.0
  %1089 = vmatprep.subr.mxu0 0.0
  %1090 = vmatpush1.msra.mxu0 0.0
  %1091 = vmatprep.subr.mxu0 0.0
  %1092 = vmatpush1.msra.mxu0 0.0
  %1093 = vmatprep.subr.mxu0 0.0
  %1094 = vmatpush1.msra.mxu0 0.0
  %1095 = vmatprep.subr.mxu0 0.0
  %1096 = vmatpush1.msra.mxu0 0.0
  %1097 = vmatprep.subr.mxu0 0.0
  %1098 = vmatpush1.msra.mxu0 0.0
  %1099 = vmatprep.subr.mxu0 0.0
  %1100 = vmatpush1.msra.mxu0 0.0
  %1101 = vmatprep.subr.mxu0 0.0
  %1102 = vmatpush1.msra.mxu0 0.0
  %1103 = vmatprep.subr.mxu0 0.0
  %1104 = vmatpush1.msra.mxu0 0.0
  %1105 = vmatprep.subr.mxu0 0.0
  %1106 = vmatpush1.msra.mxu0 0.0
  %1107 = vmatprep.subr.mxu0 0.0
  %1108 = vmatpush1.msra.mxu0 0.0
  %1109 = vmatprep.subr.mxu0 0.0
  %1110 = vmatpush1.msra.mxu0 0.0
  %1111 = vmatprep.subr.mxu0 0.0
  %1112 = vmatpush1.msra.mxu0 0.0
  %1113 = vmatprep.subr.mxu0 0.0
  %1114 = vmatpush1.msra.mxu0 0.0
  %1115 = vmatprep.mubr.f32.mxu0 0.0
  %1116 = vmatmul.mubr.f32.gmra.mrb[0].mxu0 %v1046
  %v1117 = vpop.f32.mrb[0].mxu0
  %v1118 = vadd.f32 0.0, %v1117
  %v1119 = vpop.f32.mrb[0].mxu0
  %1120 = vmatprep.mubr.f32.mxu0 0.0
  %1121 = vmatmul.mubr.f32.gmra.mrb[0].mxu0 %v1049
  %v1122 = vpop.f32.mrb[0].mxu0
  %v1123 = vadd.f32 0.0, %v1122
  %v1124 = vpop.f32.mrb[0].mxu0
  %1125 = vdwg.mxu0
  %1126 = vmatprep.subr.mxu0 0.0
  %1127 = vmatpush1.msra.mxu0 %v710
  %1128 = vmatprep.subr.mxu0 0.0
  %1129 = vmatpush1.msra.mxu0 %v711
  %1130 = vmatprep.subr.mxu0 0.0
  %1131 = vmatpush1.msra.mxu0 %v712
  %1132 = vmatprep.subr.mxu0 0.0
  %1133 = vmatpush1.msra.mxu0 %v713
  %1134 = vmatprep.subr.mxu0 0.0
  %1135 = vmatpush1.msra.mxu0 %v714
  %1136 = vmatprep.subr.mxu0 0.0
  %1137 = vmatpush1.msra.mxu0 %v715
  %1138 = vmatprep.subr.mxu0 0.0
  %1139 = vmatpush1.msra.mxu0 %v716
  %1140 = vmatprep.subr.mxu0 0.0
  %1141 = vmatpush1.msra.mxu0 %v717
  %1142 = vmatprep.subr.mxu0 0.0
  %1143 = vmatpush1.msra.mxu0 %v718
  %1144 = vmatprep.subr.mxu0 0.0
  %1145 = vmatpush1.msra.mxu0 %v719
  %1146 = vmatprep.subr.mxu0 0.0
  %1147 = vmatpush1.msra.mxu0 %v720
  %1148 = vmatprep.subr.mxu0 0.0
  %1149 = vmatpush1.msra.mxu0 %v721
  %1150 = vmatprep.subr.mxu0 0.0
  %1151 = vmatpush1.msra.mxu0 %v722
  %1152 = vmatprep.subr.mxu0 0.0
  %1153 = vmatpush1.msra.mxu0 %v723
  %1154 = vmatprep.subr.mxu0 0.0
  %1155 = vmatpush1.msra.mxu0 %v724
  %1156 = vmatprep.subr.mxu0 0.0
  %1157 = vmatpush1.msra.mxu0 %v725
  %1158 = vmatprep.subr.mxu0 0.0
  %1159 = vmatpush1.msra.mxu0 0.0
  %1160 = vmatprep.subr.mxu0 0.0
  %1161 = vmatpush1.msra.mxu0 0.0
  %1162 = vmatprep.subr.mxu0 0.0
  %1163 = vmatpush1.msra.mxu0 0.0
  %1164 = vmatprep.subr.mxu0 0.0
  %1165 = vmatpush1.msra.mxu0 0.0
  %1166 = vmatprep.subr.mxu0 0.0
  %1167 = vmatpush1.msra.mxu0 0.0
  %1168 = vmatprep.subr.mxu0 0.0
  %1169 = vmatpush1.msra.mxu0 0.0
  %1170 = vmatprep.subr.mxu0 0.0
  %1171 = vmatpush1.msra.mxu0 0.0
  %1172 = vmatprep.subr.mxu0 0.0
  %1173 = vmatpush1.msra.mxu0 0.0
  %1174 = vmatprep.subr.mxu0 0.0
  %1175 = vmatpush1.msra.mxu0 0.0
  %1176 = vmatprep.subr.mxu0 0.0
  %1177 = vmatpush1.msra.mxu0 0.0
  %1178 = vmatprep.subr.mxu0 0.0
  %1179 = vmatpush1.msra.mxu0 0.0
  %1180 = vmatprep.subr.mxu0 0.0
  %1181 = vmatpush1.msra.mxu0 0.0
  %1182 = vmatprep.subr.mxu0 0.0
  %1183 = vmatpush1.msra.mxu0 0.0
  %1184 = vmatprep.subr.mxu0 0.0
  %1185 = vmatpush1.msra.mxu0 0.0
  %1186 = vmatprep.subr.mxu0 0.0
  %1187 = vmatpush1.msra.mxu0 0.0
  %1188 = vmatprep.subr.mxu0 0.0
  %1189 = vmatpush1.msra.mxu0 0.0
  %1190 = vmatprep.mubr.f32.mxu0 0.0
  %1191 = vmatmul.mubr.f32.gmra.mrb[0].mxu0 %v1118
  %v1192 = vpop.f32.mrb[0].mxu0
  %v1193 = vadd.f32 0.0, %v1192
  %v1194 = vpop.f32.mrb[0].mxu0
  %1195 = vmatprep.mubr.f32.mxu0 0.0
  %1196 = vmatmul.mubr.f32.gmra.mrb[0].mxu0 %v1123
  %v1197 = vpop.f32.mrb[0].mxu0
  %v1198 = vadd.f32 0.0, %v1197
  %v1199 = vpop.f32.mrb[0].mxu0
  %1200 = vdwg.mxu0
  %v1201 = vadd.f32 %v1037, %v1193
  %v1202 = vadd.f32 %v1042, %v1198
  %v1203 = vlaneseq
  %v1204 = vshrl.u32 %v1203, 7
  %v1205 = vsub.s32 0, %v1204
  %v1206 = vrot.slane %v726, %v1205
  %v1207 = vadd.f32 %v1201, %v1206
  %v1208 = vadd.f32 %v1202, %v1206
  %v1209 = vmax.f32 %v1207, 0.0
  %v1210 = vmax.f32 %v1208, 0.0
  %v1211 = vlaneseq
  %v1212 = vshrl.u32 %v1211, 7
  %v1213 = vadd.s32 %v1212, 8
  %vm1214 = vcmp.lt.s32.totalorder %v1212, 0
  %v1215 = vsub.s32 0, %v1212
  %v1216 = vsel %vm1214, %v1215, %v1212
  %v1217 = vshrl.u32 %v1216, 3
  %v1218 = vand.u32 %v1216, 7
  %v1219 = vsub.s32 0, %v1218
  %v1220 = vsel %vm1214, %v1219, %v1218
  %vm1221 = vcmp.lt.s32.totalorder %v1213, 0
  %v1222 = vsub.s32 0, %v1213
  %v1223 = vsel %vm1221, %v1222, %v1213
  %v1224 = vshrl.u32 %v1223, 3
  %v1225 = vand.u32 %v1223, 7
  %v1226 = vsub.s32 0, %v1225
  %v1227 = vsel %vm1221, %v1226, %v1225
  %vm1228 = vcmp.ne.s32.totalorder %v1220, 0
  %vm1229 = vcmp.ne.s32.totalorder %v1227, 0
  %vm1230 = vcmp.lt.s32.totalorder %v1220, 0
  %vm1231 = vcmp.lt.s32.totalorder %v1227, 0
  %vm1232 = vmand %vm1230, %vm1228
  %vm1233 = vmand %vm1231, %vm1229
  %v1234 = vadd.s32 %v1220, 8
  %v1235 = vadd.s32 %v1227, 8
  %v1236 = vsel %vm1232, %v1234, %v1220
  %v1237 = vsel %vm1233, %v1235, %v1227
  %vm1238 = vcmp.lt.s32.totalorder %v1236, 4
  %vm1239 = vcmp.lt.s32.totalorder %v1237, 4
  %v1240 = vsel %vm1238, %v1209, 0.0
  %v1241 = vsel %vm1239, %v1210, 0.0
  %v1242 = vrot.slane %v1240, 4
  %v1243 = vmax.f32 %v1240, %v1242
  %v1244 = vrot.slane %v1243, 2
  %v1245 = vmax.f32 %v1243, %v1244
  %v1246 = vrot.slane %v1245, 1
  %v1247 = vmax.f32 %v1245, %v1246
  %v1248 = vrot.slane %v1241, 4
  %v1249 = vmax.f32 %v1241, %v1248
  %v1250 = vrot.slane %v1249, 2
  %v1251 = vmax.f32 %v1249, %v1250
  %v1252 = vrot.slane %v1251, 1
  %v1253 = vmax.f32 %v1251, %v1252
  %1256 = vrot.lane.b32.xlu0 %v1247, 112
  %v1257 = vpop.permute.xlu0 %1256
  %1258 = vrot.lane.b32.xlu0 %v1253, 112
  %v1259 = vpop.permute.xlu0 %1258
  %v1262 = vmax.f32 %v1247, %v1257
  %v1263 = vmax.f32 %v1253, %v1259
  %1264 = vrot.lane.b32.xlu0 %v1247, 96
  %v1265 = vpop.permute.xlu0 %1264
  %1266 = vrot.lane.b32.xlu0 %v1253, 96
  %v1267 = vpop.permute.xlu0 %1266
  %v1270 = vmax.f32 %v1262, %v1265
  %v1271 = vmax.f32 %v1263, %v1267
  %1272 = vrot.lane.b32.xlu0 %v1247, 80
  %v1273 = vpop.permute.xlu0 %1272
  %1274 = vrot.lane.b32.xlu0 %v1253, 80
  %v1275 = vpop.permute.xlu0 %1274
  %v1278 = vmax.f32 %v1270, %v1273
  %v1279 = vmax.f32 %v1271, %v1275
  %v1280 = vld [vmem:[%s2] sm:$0xff]
  %v1281 = vld [vmem:[%s2 + $0x8] sm:$0xff]
  %s1282 = scalar_lea.vmem %s3, 256
  %v1283 = vld [vmem:[%s1282] sm:$0xff]
  %v1284 = vld [vmem:[%s1282 + $0x8] sm:$0xff]
  %v1285 = vld [vmem:[%s1282 + $0x10] sm:$0xff]
  %v1286 = vld [vmem:[%s1282 + $0x18] sm:$0xff]
  %v1287 = vld [vmem:[%s1282 + $0x20] sm:$0xff]
  %v1288 = vld [vmem:[%s1282 + $0x28] sm:$0xff]
  %v1289 = vld [vmem:[%s1282 + $0x30] sm:$0xff]
  %v1290 = vld [vmem:[%s1282 + $0x38] sm:$0xff]
  %v1291 = vld [vmem:[%s1282 + $0x40] sm:$0xff]
  %v1292 = vld [vmem:[%s1282 + $0x48] sm:$0xff]
  %v1293 = vld [vmem:[%s1282 + $0x50] sm:$0xff]
  %v1294 = vld [vmem:[%s1282 + $0x58] sm:$0xff]
  %v1295 = vld [vmem:[%s1282 + $0x60] sm:$0xff]
  %v1296 = vld [vmem:[%s1282 + $0x68] sm:$0xff]
  %v1297 = vld [vmem:[%s1282 + $0x70] sm:$0xff]
  %v1298 = vld [vmem:[%s1282 + $0x78] sm:$0xff]
  %v1299 = vld [vmem:[%s6 + $0x2] sm:$0x1]
  %s1300 = scalar_lea.vmem %s4, 768
  %v1301 = vld [vmem:[%s1300] sm:$0xff]
  %v1302 = vld [vmem:[%s1300 + $0x8] sm:$0xff]
  %v1303 = vld [vmem:[%s1300 + $0x10] sm:$0xff]
  %v1304 = vld [vmem:[%s1300 + $0x18] sm:$0xff]
  %v1305 = vld [vmem:[%s1300 + $0x20] sm:$0xff]
  %v1306 = vld [vmem:[%s1300 + $0x28] sm:$0xff]
  %v1307 = vld [vmem:[%s1300 + $0x30] sm:$0xff]
  %v1308 = vld [vmem:[%s1300 + $0x38] sm:$0xff]
  %v1309 = vld [vmem:[%s1300 + $0x40] sm:$0xff]
  %v1310 = vld [vmem:[%s1300 + $0x48] sm:$0xff]
  %v1311 = vld [vmem:[%s1300 + $0x50] sm:$0xff]
  %v1312 = vld [vmem:[%s1300 + $0x58] sm:$0xff]
  %v1313 = vld [vmem:[%s1300 + $0x60] sm:$0xff]
  %v1314 = vld [vmem:[%s1300 + $0x68] sm:$0xff]
  %v1315 = vld [vmem:[%s1300 + $0x70] sm:$0xff]
  %v1316 = vld [vmem:[%s1300 + $0x78] sm:$0xff]
  %s1317 = scalar_lea.vmem %s4, 896
  %v1318 = vld [vmem:[%s1317] sm:$0xff]
  %v1319 = vld [vmem:[%s1317 + $0x8] sm:$0xff]
  %v1320 = vld [vmem:[%s1317 + $0x10] sm:$0xff]
  %v1321 = vld [vmem:[%s1317 + $0x18] sm:$0xff]
  %v1322 = vld [vmem:[%s1317 + $0x20] sm:$0xff]
  %v1323 = vld [vmem:[%s1317 + $0x28] sm:$0xff]
  %v1324 = vld [vmem:[%s1317 + $0x30] sm:$0xff]
  %v1325 = vld [vmem:[%s1317 + $0x38] sm:$0xff]
  %v1326 = vld [vmem:[%s1317 + $0x40] sm:$0xff]
  %v1327 = vld [vmem:[%s1317 + $0x48] sm:$0xff]
  %v1328 = vld [vmem:[%s1317 + $0x50] sm:$0xff]
  %v1329 = vld [vmem:[%s1317 + $0x58] sm:$0xff]
  %v1330 = vld [vmem:[%s1317 + $0x60] sm:$0xff]
  %v1331 = vld [vmem:[%s1317 + $0x68] sm:$0xff]
  %v1332 = vld [vmem:[%s1317 + $0x70] sm:$0xff]
  %v1333 = vld [vmem:[%s1317 + $0x78] sm:$0xff]
  %s1334 = scalar_lea.vmem %s4, 1024
  %v1335 = vld [vmem:[%s1334] sm:$0xff]
  %v1336 = vld [vmem:[%s1334 + $0x8] sm:$0xff]
  %v1337 = vld [vmem:[%s1334 + $0x10] sm:$0xff]
  %v1338 = vld [vmem:[%s1334 + $0x18] sm:$0xff]
  %v1339 = vld [vmem:[%s1334 + $0x20] sm:$0xff]
  %v1340 = vld [vmem:[%s1334 + $0x28] sm:$0xff]
  %v1341 = vld [vmem:[%s1334 + $0x30] sm:$0xff]
  %v1342 = vld [vmem:[%s1334 + $0x38] sm:$0xff]
  %v1343 = vld [vmem:[%s1334 + $0x40] sm:$0xff]
  %v1344 = vld [vmem:[%s1334 + $0x48] sm:$0xff]
  %v1345 = vld [vmem:[%s1334 + $0x50] sm:$0xff]
  %v1346 = vld [vmem:[%s1334 + $0x58] sm:$0xff]
  %v1347 = vld [vmem:[%s1334 + $0x60] sm:$0xff]
  %v1348 = vld [vmem:[%s1334 + $0x68] sm:$0xff]
  %v1349 = vld [vmem:[%s1334 + $0x70] sm:$0xff]
  %v1350 = vld [vmem:[%s1334 + $0x78] sm:$0xff]
  %v1351 = vld [vmem:[%s6 + $0x5] sm:$0x1]
  %v1352 = vlaneseq
  %v1353 = vshrl.u32 %v1352, 7
  %v1354 = vsub.s32 0, %v1353
  %v1355 = vrot.slane %v1299, %v1354
  %1356 = vmatprep.subr.mxu0 0.0
  %1357 = vmatpush1.msra.mxu0 %v1283
  %1358 = vmatprep.subr.mxu0 0.0
  %1359 = vmatpush1.msra.mxu0 %v1284
  %1360 = vmatprep.subr.mxu0 0.0
  %1361 = vmatpush1.msra.mxu0 %v1285
  %1362 = vmatprep.subr.mxu0 0.0
  %1363 = vmatpush1.msra.mxu0 %v1286
  %1364 = vmatprep.subr.mxu0 0.0
  %1365 = vmatpush1.msra.mxu0 %v1287
  %1366 = vmatprep.subr.mxu0 0.0
  %1367 = vmatpush1.msra.mxu0 %v1288
  %1368 = vmatprep.subr.mxu0 0.0
  %1369 = vmatpush1.msra.mxu0 %v1289
  %1370 = vmatprep.subr.mxu0 0.0
  %1371 = vmatpush1.msra.mxu0 %v1290
  %1372 = vmatprep.subr.mxu0 0.0
  %1373 = vmatpush1.msra.mxu0 %v1291
  %1374 = vmatprep.subr.mxu0 0.0
  %1375 = vmatpush1.msra.mxu0 %v1292
  %1376 = vmatprep.subr.mxu0 0.0
  %1377 = vmatpush1.msra.mxu0 %v1293
  %1378 = vmatprep.subr.mxu0 0.0
  %1379 = vmatpush1.msra.mxu0 %v1294
  %1380 = vmatprep.subr.mxu0 0.0
  %1381 = vmatpush1.msra.mxu0 %v1295
  %1382 = vmatprep.subr.mxu0 0.0
  %1383 = vmatpush1.msra.mxu0 %v1296
  %1384 = vmatprep.subr.mxu0 0.0
  %1385 = vmatpush1.msra.mxu0 %v1297
  %1386 = vmatprep.subr.mxu0 0.0
  %1387 = vmatpush1.msra.mxu0 %v1298
  %1388 = vmatprep.subr.mxu0 0.0
  %1389 = vmatpush1.msra.mxu0 0.0
  %1390 = vmatprep.subr.mxu0 0.0
  %1391 = vmatpush1.msra.mxu0 0.0
  %1392 = vmatprep.subr.mxu0 0.0
  %1393 = vmatpush1.msra.mxu0 0.0
  %1394 = vmatprep.subr.mxu0 0.0
  %1395 = vmatpush1.msra.mxu0 0.0
  %1396 = vmatprep.subr.mxu0 0.0
  %1397 = vmatpush1.msra.mxu0 0.0
  %1398 = vmatprep.subr.mxu0 0.0
  %1399 = vmatpush1.msra.mxu0 0.0
  %1400 = vmatprep.subr.mxu0 0.0
  %1401 = vmatpush1.msra.mxu0 0.0
  %1402 = vmatprep.subr.mxu0 0.0
  %1403 = vmatpush1.msra.mxu0 0.0
  %1404 = vmatprep.subr.mxu0 0.0
  %1405 = vmatpush1.msra.mxu0 0.0
  %1406 = vmatprep.subr.mxu0 0.0
  %1407 = vmatpush1.msra.mxu0 0.0
  %1408 = vmatprep.subr.mxu0 0.0
  %1409 = vmatpush1.msra.mxu0 0.0
  %1410 = vmatprep.subr.mxu0 0.0
  %1411 = vmatpush1.msra.mxu0 0.0
  %1412 = vmatprep.subr.mxu0 0.0
  %1413 = vmatpush1.msra.mxu0 0.0
  %1414 = vmatprep.subr.mxu0 0.0
  %1415 = vmatpush1.msra.mxu0 0.0
  %1416 = vmatprep.subr.mxu0 0.0
  %1417 = vmatpush1.msra.mxu0 0.0
  %1418 = vmatprep.subr.mxu0 0.0
  %1419 = vmatpush1.msra.mxu0 0.0
  %1420 = vmatprep.mubr.f32.mxu0 0.0
  %1421 = vmatmul.mubr.f32.gmra.mrb[0].mxu0 %v1280
  %v1422 = vpop.f32.mrb[0].mxu0
  %v1423 = vadd.f32 %v1355, %v1422
  %v1424 = vpop.f32.mrb[0].mxu0
  %1425 = vmatprep.mubr.f32.mxu0 0.0
  %1426 = vmatmul.mubr.f32.gmra.mrb[0].mxu0 %v1281
  %v1427 = vpop.f32.mrb[0].mxu0
  %v1428 = vadd.f32 %v1355, %v1427
  %v1429 = vpop.f32.mrb[0].mxu0
  %1430 = vdwg.mxu0
  %v1431 = vmax.f32 %v1423, 0.0
  %v1432 = vmax.f32 %v1428, 0.0
  %1433 = vmatprep.subr.mxu0 0.0
  %1434 = vmatpush1.msra.mxu0 %v1431
  %1435 = vmatprep.subr.mxu0 0.0
  %1436 = vmatpush1.msra.mxu0 %v1432
  %1437 = vmatprep.subr.mxu0 0.0
  %1438 = vmatpush1.msra.mxu0 0.0
  %1439 = vmatprep.subr.mxu0 0.0
  %1440 = vmatpush1.msra.mxu0 0.0
  %1441 = vmatprep.subr.mxu0 0.0
  %1442 = vmatpush1.msra.mxu0 0.0
  %1443 = vmatprep.subr.mxu0 0.0
  %1444 = vmatpush1.msra.mxu0 0.0
  %1445 = vmatprep.subr.mxu0 0.0
  %1446 = vmatpush1.msra.mxu0 0.0
  %1447 = vmatprep.subr.mxu0 0.0
  %1448 = vmatpush1.msra.mxu0 0.0
  %1449 = vmatprep.subr.mxu0 0.0
  %1450 = vmatpush1.msra.mxu0 0.0
  %1451 = vmatprep.subr.mxu0 0.0
  %1452 = vmatpush1.msra.mxu0 0.0
  %1453 = vmatprep.subr.mxu0 0.0
  %1454 = vmatpush1.msra.mxu0 0.0
  %1455 = vmatprep.subr.mxu0 0.0
  %1456 = vmatpush1.msra.mxu0 0.0
  %1457 = vmatprep.subr.mxu0 0.0
  %1458 = vmatpush1.msra.mxu0 0.0
  %1459 = vmatprep.subr.mxu0 0.0
  %1460 = vmatpush1.msra.mxu0 0.0
  %1461 = vmatprep.subr.mxu0 0.0
  %1462 = vmatpush1.msra.mxu0 0.0
  %1463 = vmatprep.subr.mxu0 0.0
  %1464 = vmatpush1.msra.mxu0 0.0
  %1465 = vmatprep.subr.mxu0 0.0
  %1466 = vmatpush1.msra.mxu0 0.0
  %1467 = vmatprep.subr.mxu0 0.0
  %1468 = vmatpush1.msra.mxu0 0.0
  %1469 = vmatprep.subr.mxu0 0.0
  %1470 = vmatpush1.msra.mxu0 0.0
  %1471 = vmatprep.subr.mxu0 0.0
  %1472 = vmatpush1.msra.mxu0 0.0
  %1473 = vmatprep.subr.mxu0 0.0
  %1474 = vmatpush1.msra.mxu0 0.0
  %1475 = vmatprep.subr.mxu0 0.0
  %1476 = vmatpush1.msra.mxu0 0.0
  %1477 = vmatprep.subr.mxu0 0.0
  %1478 = vmatpush1.msra.mxu0 0.0
  %1479 = vmatprep.subr.mxu0 0.0
  %1480 = vmatpush1.msra.mxu0 0.0
  %1481 = vmatprep.subr.mxu0 0.0
  %1482 = vmatpush1.msra.mxu0 0.0
  %1483 = vmatprep.subr.mxu0 0.0
  %1484 = vmatpush1.msra.mxu0 0.0
  %1485 = vmatprep.subr.mxu0 0.0
  %1486 = vmatpush1.msra.mxu0 0.0
  %1487 = vmatprep.subr.mxu0 0.0
  %1488 = vmatpush1.msra.mxu0 0.0
  %1489 = vmatprep.subr.mxu0 0.0
  %1490 = vmatpush1.msra.mxu0 0.0
  %1491 = vmatprep.subr.mxu0 0.0
  %1492 = vmatpush1.msra.mxu0 0.0
  %1493 = vmatprep.subr.mxu0 0.0
  %1494 = vmatpush1.msra.mxu0 0.0
  %1495 = vmatprep.subr.mxu0 0.0
  %1496 = vmatpush1.msra.mxu0 0.0
  %1497 = vmatprep.mubr.f32.mxu0 0.0
  %1498 = vmatmul.mubr.f32.gmra.mrb[0].mxu0 %v815
  %v1499 = vpop.f32.mrb[0].mxu0
  %v1500 = vadd.f32 0.0, %v1499
  %v1501 = vpop.f32.mrb[0].mxu0
  %1502 = vmatprep.mubr.f32.mxu0 0.0
  %1503 = vmatmul.mubr.f32.gmra.mrb[0].mxu0 %v818
  %v1504 = vpop.f32.mrb[0].mxu0
  %v1505 = vadd.f32 0.0, %v1504
  %v1506 = vpop.f32.mrb[0].mxu0
  %1507 = vdwg.mxu0
  %1508 = vmatprep.subr.mxu0 0.0
  %1509 = vmatpush1.msra.mxu0 %v1301
  %1510 = vmatprep.subr.mxu0 0.0
  %1511 = vmatpush1.msra.mxu0 %v1302
  %1512 = vmatprep.subr.mxu0 0.0
  %1513 = vmatpush1.msra.mxu0 %v1303
  %1514 = vmatprep.subr.mxu0 0.0
  %1515 = vmatpush1.msra.mxu0 %v1304
  %1516 = vmatprep.subr.mxu0 0.0
  %1517 = vmatpush1.msra.mxu0 %v1305
  %1518 = vmatprep.subr.mxu0 0.0
  %1519 = vmatpush1.msra.mxu0 %v1306
  %1520 = vmatprep.subr.mxu0 0.0
  %1521 = vmatpush1.msra.mxu0 %v1307
  %1522 = vmatprep.subr.mxu0 0.0
  %1523 = vmatpush1.msra.mxu0 %v1308
  %1524 = vmatprep.subr.mxu0 0.0
  %1525 = vmatpush1.msra.mxu0 %v1309
  %1526 = vmatprep.subr.mxu0 0.0
  %1527 = vmatpush1.msra.mxu0 %v1310
  %1528 = vmatprep.subr.mxu0 0.0
  %1529 = vmatpush1.msra.mxu0 %v1311
  %1530 = vmatprep.subr.mxu0 0.0
  %1531 = vmatpush1.msra.mxu0 %v1312
  %1532 = vmatprep.subr.mxu0 0.0
  %1533 = vmatpush1.msra.mxu0 %v1313
  %1534 = vmatprep.subr.mxu0 0.0
  %1535 = vmatpush1.msra.mxu0 %v1314
  %1536 = vmatprep.subr.mxu0 0.0
  %1537 = vmatpush1.msra.mxu0 %v1315
  %1538 = vmatprep.subr.mxu0 0.0
  %1539 = vmatpush1.msra.mxu0 %v1316
  %1540 = vmatprep.subr.mxu0 0.0
  %1541 = vmatpush1.msra.mxu0 0.0
  %1542 = vmatprep.subr.mxu0 0.0
  %1543 = vmatpush1.msra.mxu0 0.0
  %1544 = vmatprep.subr.mxu0 0.0
  %1545 = vmatpush1.msra.mxu0 0.0
  %1546 = vmatprep.subr.mxu0 0.0
  %1547 = vmatpush1.msra.mxu0 0.0
  %1548 = vmatprep.subr.mxu0 0.0
  %1549 = vmatpush1.msra.mxu0 0.0
  %1550 = vmatprep.subr.mxu0 0.0
  %1551 = vmatpush1.msra.mxu0 0.0
  %1552 = vmatprep.subr.mxu0 0.0
  %1553 = vmatpush1.msra.mxu0 0.0
  %1554 = vmatprep.subr.mxu0 0.0
  %1555 = vmatpush1.msra.mxu0 0.0
  %1556 = vmatprep.subr.mxu0 0.0
  %1557 = vmatpush1.msra.mxu0 0.0
  %1558 = vmatprep.subr.mxu0 0.0
  %1559 = vmatpush1.msra.mxu0 0.0
  %1560 = vmatprep.subr.mxu0 0.0
  %1561 = vmatpush1.msra.mxu0 0.0
  %1562 = vmatprep.subr.mxu0 0.0
  %1563 = vmatpush1.msra.mxu0 0.0
  %1564 = vmatprep.subr.mxu0 0.0
  %1565 = vmatpush1.msra.mxu0 0.0
  %1566 = vmatprep.subr.mxu0 0.0
  %1567 = vmatpush1.msra.mxu0 0.0
  %1568 = vmatprep.subr.mxu0 0.0
  %1569 = vmatpush1.msra.mxu0 0.0
  %1570 = vmatprep.subr.mxu0 0.0
  %1571 = vmatpush1.msra.mxu0 0.0
  %1572 = vmatprep.mubr.f32.mxu0 0.0
  %1573 = vmatmul.mubr.f32.gmra.mrb[0].mxu0 %v1500
  %v1574 = vpop.f32.mrb[0].mxu0
  %v1575 = vadd.f32 0.0, %v1574
  %v1576 = vpop.f32.mrb[0].mxu0
  %1577 = vmatprep.mubr.f32.mxu0 0.0
  %1578 = vmatmul.mubr.f32.gmra.mrb[0].mxu0 %v1505
  %v1579 = vpop.f32.mrb[0].mxu0
  %v1580 = vadd.f32 0.0, %v1579
  %v1581 = vpop.f32.mrb[0].mxu0
  %1582 = vdwg.mxu0
  %1583 = vmatprep.subr.mxu0 0.0
  %1584 = vmatpush1.msra.mxu0 %v1318
  %1585 = vmatprep.subr.mxu0 0.0
  %1586 = vmatpush1.msra.mxu0 %v1319
  %1587 = vmatprep.subr.mxu0 0.0
  %1588 = vmatpush1.msra.mxu0 %v1320
  %1589 = vmatprep.subr.mxu0 0.0
  %1590 = vmatpush1.msra.mxu0 %v1321
  %1591 = vmatprep.subr.mxu0 0.0
  %1592 = vmatpush1.msra.mxu0 %v1322
  %1593 = vmatprep.subr.mxu0 0.0
  %1594 = vmatpush1.msra.mxu0 %v1323
  %1595 = vmatprep.subr.mxu0 0.0
  %1596 = vmatpush1.msra.mxu0 %v1324
  %1597 = vmatprep.subr.mxu0 0.0
  %1598 = vmatpush1.msra.mxu0 %v1325
  %1599 = vmatprep.subr.mxu0 0.0
  %1600 = vmatpush1.msra.mxu0 %v1326
  %1601 = vmatprep.subr.mxu0 0.0
  %1602 = vmatpush1.msra.mxu0 %v1327
  %1603 = vmatprep.subr.mxu0 0.0
  %1604 = vmatpush1.msra.mxu0 %v1328
  %1605 = vmatprep.subr.mxu0 0.0
  %1606 = vmatpush1.msra.mxu0 %v1329
  %1607 = vmatprep.subr.mxu0 0.0
  %1608 = vmatpush1.msra.mxu0 %v1330
  %1609 = vmatprep.subr.mxu0 0.0
  %1610 = vmatpush1.msra.mxu0 %v1331
  %1611 = vmatprep.subr.mxu0 0.0
  %1612 = vmatpush1.msra.mxu0 %v1332
  %1613 = vmatprep.subr.mxu0 0.0
  %1614 = vmatpush1.msra.mxu0 %v1333
  %1615 = vmatprep.subr.mxu0 0.0
  %1616 = vmatpush1.msra.mxu0 0.0
  %1617 = vmatprep.subr.mxu0 0.0
  %1618 = vmatpush1.msra.mxu0 0.0
  %1619 = vmatprep.subr.mxu0 0.0
  %1620 = vmatpush1.msra.mxu0 0.0
  %1621 = vmatprep.subr.mxu0 0.0
  %1622 = vmatpush1.msra.mxu0 0.0
  %1623 = vmatprep.subr.mxu0 0.0
  %1624 = vmatpush1.msra.mxu0 0.0
  %1625 = vmatprep.subr.mxu0 0.0
  %1626 = vmatpush1.msra.mxu0 0.0
  %1627 = vmatprep.subr.mxu0 0.0
  %1628 = vmatpush1.msra.mxu0 0.0
  %1629 = vmatprep.subr.mxu0 0.0
  %1630 = vmatpush1.msra.mxu0 0.0
  %1631 = vmatprep.subr.mxu0 0.0
  %1632 = vmatpush1.msra.mxu0 0.0
  %1633 = vmatprep.subr.mxu0 0.0
  %1634 = vmatpush1.msra.mxu0 0.0
  %1635 = vmatprep.subr.mxu0 0.0
  %1636 = vmatpush1.msra.mxu0 0.0
  %1637 = vmatprep.subr.mxu0 0.0
  %1638 = vmatpush1.msra.mxu0 0.0
  %1639 = vmatprep.subr.mxu0 0.0
  %1640 = vmatpush1.msra.mxu0 0.0
  %1641 = vmatprep.subr.mxu0 0.0
  %1642 = vmatpush1.msra.mxu0 0.0
  %1643 = vmatprep.subr.mxu0 0.0
  %1644 = vmatpush1.msra.mxu0 0.0
  %1645 = vmatprep.subr.mxu0 0.0
  %1646 = vmatpush1.msra.mxu0 0.0
  %1647 = vmatprep.mubr.f32.mxu0 0.0
  %1648 = vmatmul.mubr.f32.gmra.mrb[0].mxu0 %v1431
  %v1649 = vpop.f32.mrb[0].mxu0
  %v1650 = vadd.f32 %v1575, %v1649
  %v1651 = vpop.f32.mrb[0].mxu0
  %1652 = vmatprep.mubr.f32.mxu0 0.0
  %1653 = vmatmul.mubr.f32.gmra.mrb[0].mxu0 %v1432
  %v1654 = vpop.f32.mrb[0].mxu0
  %v1655 = vadd.f32 %v1580, %v1654
  %v1656 = vpop.f32.mrb[0].mxu0
  %1657 = vdwg.mxu0
  %1658 = vmatprep.subr.mxu0 0.0
  %1659 = vmatpush1.msra.mxu0 %v1431
  %1660 = vmatprep.subr.mxu0 0.0
  %1661 = vmatpush1.msra.mxu0 %v1432
  %1662 = vmatprep.subr.mxu0 0.0
  %1663 = vmatpush1.msra.mxu0 0.0
  %1664 = vmatprep.subr.mxu0 0.0
  %1665 = vmatpush1.msra.mxu0 0.0
  %1666 = vmatprep.subr.mxu0 0.0
  %1667 = vmatpush1.msra.mxu0 0.0
  %1668 = vmatprep.subr.mxu0 0.0
  %1669 = vmatpush1.msra.mxu0 0.0
  %1670 = vmatprep.subr.mxu0 0.0
  %1671 = vmatpush1.msra.mxu0 0.0
  %1672 = vmatprep.subr.mxu0 0.0
  %1673 = vmatpush1.msra.mxu0 0.0
  %1674 = vmatprep.subr.mxu0 0.0
  %1675 = vmatpush1.msra.mxu0 0.0
  %1676 = vmatprep.subr.mxu0 0.0
  %1677 = vmatpush1.msra.mxu0 0.0
  %1678 = vmatprep.subr.mxu0 0.0
  %1679 = vmatpush1.msra.mxu0 0.0
  %1680 = vmatprep.subr.mxu0 0.0
  %1681 = vmatpush1.msra.mxu0 0.0
  %1682 = vmatprep.subr.mxu0 0.0
  %1683 = vmatpush1.msra.mxu0 0.0
  %1684 = vmatprep.subr.mxu0 0.0
  %1685 = vmatpush1.msra.mxu0 0.0
  %1686 = vmatprep.subr.mxu0 0.0
  %1687 = vmatpush1.msra.mxu0 0.0
  %1688 = vmatprep.subr.mxu0 0.0
  %1689 = vmatpush1.msra.mxu0 0.0
  %1690 = vmatprep.subr.mxu0 0.0
  %1691 = vmatpush1.msra.mxu0 0.0
  %1692 = vmatprep.subr.mxu0 0.0
  %1693 = vmatpush1.msra.mxu0 0.0
  %1694 = vmatprep.subr.mxu0 0.0
  %1695 = vmatpush1.msra.mxu0 0.0
  %1696 = vmatprep.subr.mxu0 0.0
  %1697 = vmatpush1.msra.mxu0 0.0
  %1698 = vmatprep.subr.mxu0 0.0
  %1699 = vmatpush1.msra.mxu0 0.0
  %1700 = vmatprep.subr.mxu0 0.0
  %1701 = vmatpush1.msra.mxu0 0.0
  %1702 = vmatprep.subr.mxu0 0.0
  %1703 = vmatpush1.msra.mxu0 0.0
  %1704 = vmatprep.subr.mxu0 0.0
  %1705 = vmatpush1.msra.mxu0 0.0
  %1706 = vmatprep.subr.mxu0 0.0
  %1707 = vmatpush1.msra.mxu0 0.0
  %1708 = vmatprep.subr.mxu0 0.0
  %1709 = vmatpush1.msra.mxu0 0.0
  %1710 = vmatprep.subr.mxu0 0.0
  %1711 = vmatpush1.msra.mxu0 0.0
  %1712 = vmatprep.subr.mxu0 0.0
  %1713 = vmatpush1.msra.mxu0 0.0
  %1714 = vmatprep.subr.mxu0 0.0
  %1715 = vmatpush1.msra.mxu0 0.0
  %1716 = vmatprep.subr.mxu0 0.0
  %1717 = vmatpush1.msra.mxu0 0.0
  %1718 = vmatprep.subr.mxu0 0.0
  %1719 = vmatpush1.msra.mxu0 0.0
  %1720 = vmatprep.subr.mxu0 0.0
  %1721 = vmatpush1.msra.mxu0 0.0
  %1722 = vmatprep.mubr.f32.mxu0 0.0
  %1723 = vmatmul.mubr.f32.gmra.mrb[0].mxu0 %v1046
  %v1724 = vpop.f32.mrb[0].mxu0
  %v1725 = vadd.f32 0.0, %v1724
  %v1726 = vpop.f32.mrb[0].mxu0
  %1727 = vmatprep.mubr.f32.mxu0 0.0
  %1728 = vmatmul.mubr.f32.gmra.mrb[0].mxu0 %v1049
  %v1729 = vpop.f32.mrb[0].mxu0
  %v1730 = vadd.f32 0.0, %v1729
  %v1731 = vpop.f32.mrb[0].mxu0
  %1732 = vdwg.mxu0
  %1733 = vmatprep.subr.mxu0 0.0
  %1734 = vmatpush1.msra.mxu0 %v1335
  %1735 = vmatprep.subr.mxu0 0.0
  %1736 = vmatpush1.msra.mxu0 %v1336
  %1737 = vmatprep.subr.mxu0 0.0
  %1738 = vmatpush1.msra.mxu0 %v1337
  %1739 = vmatprep.subr.mxu0 0.0
  %1740 = vmatpush1.msra.mxu0 %v1338
  %1741 = vmatprep.subr.mxu0 0.0
  %1742 = vmatpush1.msra.mxu0 %v1339
  %1743 = vmatprep.subr.mxu0 0.0
  %1744 = vmatpush1.msra.mxu0 %v1340
  %1745 = vmatprep.subr.mxu0 0.0
  %1746 = vmatpush1.msra.mxu0 %v1341
  %1747 = vmatprep.subr.mxu0 0.0
  %1748 = vmatpush1.msra.mxu0 %v1342
  %1749 = vmatprep.subr.mxu0 0.0
  %1750 = vmatpush1.msra.mxu0 %v1343
  %1751 = vmatprep.subr.mxu0 0.0
  %1752 = vmatpush1.msra.mxu0 %v1344
  %1753 = vmatprep.subr.mxu0 0.0
  %1754 = vmatpush1.msra.mxu0 %v1345
  %1755 = vmatprep.subr.mxu0 0.0
  %1756 = vmatpush1.msra.mxu0 %v1346
  %1757 = vmatprep.subr.mxu0 0.0
  %1758 = vmatpush1.msra.mxu0 %v1347
  %1759 = vmatprep.subr.mxu0 0.0
  %1760 = vmatpush1.msra.mxu0 %v1348
  %1761 = vmatprep.subr.mxu0 0.0
  %1762 = vmatpush1.msra.mxu0 %v1349
  %1763 = vmatprep.subr.mxu0 0.0
  %1764 = vmatpush1.msra.mxu0 %v1350
  %1765 = vmatprep.subr.mxu0 0.0
  %1766 = vmatpush1.msra.mxu0 0.0
  %1767 = vmatprep.subr.mxu0 0.0
  %1768 = vmatpush1.msra.mxu0 0.0
  %1769 = vmatprep.subr.mxu0 0.0
  %1770 = vmatpush1.msra.mxu0 0.0
  %1771 = vmatprep.subr.mxu0 0.0
  %1772 = vmatpush1.msra.mxu0 0.0
  %1773 = vmatprep.subr.mxu0 0.0
  %1774 = vmatpush1.msra.mxu0 0.0
  %1775 = vmatprep.subr.mxu0 0.0
  %1776 = vmatpush1.msra.mxu0 0.0
  %1777 = vmatprep.subr.mxu0 0.0
  %1778 = vmatpush1.msra.mxu0 0.0
  %1779 = vmatprep.subr.mxu0 0.0
  %1780 = vmatpush1.msra.mxu0 0.0
  %1781 = vmatprep.subr.mxu0 0.0
  %1782 = vmatpush1.msra.mxu0 0.0
  %1783 = vmatprep.subr.mxu0 0.0
  %1784 = vmatpush1.msra.mxu0 0.0
  %1785 = vmatprep.subr.mxu0 0.0
  %1786 = vmatpush1.msra.mxu0 0.0
  %1787 = vmatprep.subr.mxu0 0.0
  %1788 = vmatpush1.msra.mxu0 0.0
  %1789 = vmatprep.subr.mxu0 0.0
  %1790 = vmatpush1.msra.mxu0 0.0
  %1791 = vmatprep.subr.mxu0 0.0
  %1792 = vmatpush1.msra.mxu0 0.0
  %1793 = vmatprep.subr.mxu0 0.0
  %1794 = vmatpush1.msra.mxu0 0.0
  %1795 = vmatprep.subr.mxu0 0.0
  %1796 = vmatpush1.msra.mxu0 0.0
  %1797 = vmatprep.mubr.f32.mxu0 0.0
  %1798 = vmatmul.mubr.f32.gmra.mrb[0].mxu0 %v1725
  %v1799 = vpop.f32.mrb[0].mxu0
  %v1800 = vadd.f32 0.0, %v1799
  %v1801 = vpop.f32.mrb[0].mxu0
  %1802 = vmatprep.mubr.f32.mxu0 0.0
  %1803 = vmatmul.mubr.f32.gmra.mrb[0].mxu0 %v1730
  %v1804 = vpop.f32.mrb[0].mxu0
  %v1805 = vadd.f32 0.0, %v1804
  %v1806 = vpop.f32.mrb[0].mxu0
  %1807 = vdwg.mxu0
  %v1808 = vadd.f32 %v1650, %v1800
  %v1809 = vadd.f32 %v1655, %v1805
  %v1810 = vlaneseq
  %v1811 = vshrl.u32 %v1810, 7
  %v1812 = vsub.s32 0, %v1811
  %v1813 = vrot.slane %v1351, %v1812
  %v1814 = vadd.f32 %v1808, %v1813
  %v1815 = vadd.f32 %v1809, %v1813
  %v1816 = vmax.f32 %v1814, 0.0
  %v1817 = vmax.f32 %v1815, 0.0
  %v1818 = vsel %vm1238, %v1816, 0.0
  %v1819 = vsel %vm1239, %v1817, 0.0
  %v1820 = vrot.slane %v1818, 4
  %v1821 = vmax.f32 %v1818, %v1820
  %v1822 = vrot.slane %v1821, 2
  %v1823 = vmax.f32 %v1821, %v1822
  %v1824 = vrot.slane %v1823, 1
  %v1825 = vmax.f32 %v1823, %v1824
  %v1826 = vrot.slane %v1819, 4
  %v1827 = vmax.f32 %v1819, %v1826
  %v1828 = vrot.slane %v1827, 2
  %v1829 = vmax.f32 %v1827, %v1828
  %v1830 = vrot.slane %v1829, 1
  %v1831 = vmax.f32 %v1829, %v1830
  %1834 = vrot.lane.b32.xlu0 %v1825, 112
  %v1835 = vpop.permute.xlu0 %1834
  %1836 = vrot.lane.b32.xlu0 %v1831, 112
  %v1837 = vpop.permute.xlu0 %1836
  %v1840 = vmax.f32 %v1825, %v1835
  %v1841 = vmax.f32 %v1831, %v1837
  %1842 = vrot.lane.b32.xlu0 %v1825, 96
  %v1843 = vpop.permute.xlu0 %1842
  %1844 = vrot.lane.b32.xlu0 %v1831, 96
  %v1845 = vpop.permute.xlu0 %1844
  %v1848 = vmax.f32 %v1840, %v1843
  %v1849 = vmax.f32 %v1841, %v1845
  %1850 = vrot.lane.b32.xlu0 %v1825, 80
  %v1851 = vpop.permute.xlu0 %1850
  %1852 = vrot.lane.b32.xlu0 %v1831, 80
  %v1853 = vpop.permute.xlu0 %1852
  %v1856 = vmax.f32 %v1848, %v1851
  %v1857 = vmax.f32 %v1849, %v1853
  %v1858 = vld [vmem:[%s7] sm:$0xff]
  %v1859 = vld [vmem:[%s7 + $0x8] sm:$0xff]
  %s1860 = scalar_lea.vmem %s7, 16
  %v1861 = vld [vmem:[%s1860] sm:$0xff]
  %v1862 = vld [vmem:[%s1860 + $0x8] sm:$0xff]
  %v1865 = vrot.slane %v1279, 7
  %vm1866 = vcmask 1041409
  %v1867 = vsel %vm1866, %v1865, %v1278
  %v1868 = vsel %vm189, %v1867, 0
  %1870 = vmatprep.subr.mxu0 0.0
  %1871 = vmatpush1.msra.mxu0 %v1861
  %1872 = vmatprep.subr.mxu0 0.0
  %1873 = vmatpush1.msra.mxu0 %v1862
  %1874 = vmatprep.subr.mxu0 0.0
  %1875 = vmatpush1.msra.mxu0 0.0
  %1876 = vmatprep.subr.mxu0 0.0
  %1877 = vmatpush1.msra.mxu0 0.0
  %1878 = vmatprep.subr.mxu0 0.0
  %1879 = vmatpush1.msra.mxu0 0.0
  %1880 = vmatprep.subr.mxu0 0.0
  %1881 = vmatpush1.msra.mxu0 0.0
  %1882 = vmatprep.subr.mxu0 0.0
  %1883 = vmatpush1.msra.mxu0 0.0
  %1884 = vmatprep.subr.mxu0 0.0
  %1885 = vmatpush1.msra.mxu0 0.0
  %1886 = vmatprep.subr.mxu0 0.0
  %1887 = vmatpush1.msra.mxu0 0.0
  %1888 = vmatprep.subr.mxu0 0.0
  %1889 = vmatpush1.msra.mxu0 0.0
  %1890 = vmatprep.subr.mxu0 0.0
  %1891 = vmatpush1.msra.mxu0 0.0
  %1892 = vmatprep.subr.mxu0 0.0
  %1893 = vmatpush1.msra.mxu0 0.0
  %1894 = vmatprep.subr.mxu0 0.0
  %1895 = vmatpush1.msra.mxu0 0.0
  %1896 = vmatprep.subr.mxu0 0.0
  %1897 = vmatpush1.msra.mxu0 0.0
  %1898 = vmatprep.subr.mxu0 0.0
  %1899 = vmatpush1.msra.mxu0 0.0
  %1900 = vmatprep.subr.mxu0 0.0
  %1901 = vmatpush1.msra.mxu0 0.0
  %1902 = vmatprep.subr.mxu0 0.0
  %1903 = vmatpush1.msra.mxu0 0.0
  %1904 = vmatprep.subr.mxu0 0.0
  %1905 = vmatpush1.msra.mxu0 0.0
  %1906 = vmatprep.subr.mxu0 0.0
  %1907 = vmatpush1.msra.mxu0 0.0
  %1908 = vmatprep.subr.mxu0 0.0
  %1909 = vmatpush1.msra.mxu0 0.0
  %1910 = vmatprep.subr.mxu0 0.0
  %1911 = vmatpush1.msra.mxu0 0.0
  %1912 = vmatprep.subr.mxu0 0.0
  %1913 = vmatpush1.msra.mxu0 0.0
  %1914 = vmatprep.subr.mxu0 0.0
  %1915 = vmatpush1.msra.mxu0 0.0
  %1916 = vmatprep.subr.mxu0 0.0
  %1917 = vmatpush1.msra.mxu0 0.0
  %1918 = vmatprep.subr.mxu0 0.0
  %1919 = vmatpush1.msra.mxu0 0.0
  %1920 = vmatprep.subr.mxu0 0.0
  %1921 = vmatpush1.msra.mxu0 0.0
  %1922 = vmatprep.subr.mxu0 0.0
  %1923 = vmatpush1.msra.mxu0 0.0
  %1924 = vmatprep.subr.mxu0 0.0
  %1925 = vmatpush1.msra.mxu0 0.0
  %1926 = vmatprep.subr.mxu0 0.0
  %1927 = vmatpush1.msra.mxu0 0.0
  %1928 = vmatprep.subr.mxu0 0.0
  %1929 = vmatpush1.msra.mxu0 0.0
  %1930 = vmatprep.subr.mxu0 0.0
  %1931 = vmatpush1.msra.mxu0 0.0
  %1932 = vmatprep.subr.mxu0 0.0
  %1933 = vmatpush1.msra.mxu0 0.0
  %1934 = vmatprep.mubr.f32.mxu0 0.0
  %1935 = vmatmul.mubr.f32.gmra.mrb[0].mxu0 %v1868
  %v1936 = vpop.f32.mrb[0].mxu0
  %v1937 = vadd.f32 0.0, %v1936
  %v1938 = vpop.f32.mrb[0].mxu0
  %1939 = vdwg.mxu0
  %v1942 = vrot.slane %v656, 7
  %v1943 = vsel %vm1866, %v1942, %v655
  %v1944 = vsel %vm189, %v1943, 0
  %1946 = vmatprep.subr.mxu0 0.0
  %1947 = vmatpush1.msra.mxu0 %v1858
  %1948 = vmatprep.subr.mxu0 0.0
  %1949 = vmatpush1.msra.mxu0 %v1859
  %1950 = vmatprep.subr.mxu0 0.0
  %1951 = vmatpush1.msra.mxu0 0.0
  %1952 = vmatprep.subr.mxu0 0.0
  %1953 = vmatpush1.msra.mxu0 0.0
  %1954 = vmatprep.subr.mxu0 0.0
  %1955 = vmatpush1.msra.mxu0 0.0
  %1956 = vmatprep.subr.mxu0 0.0
  %1957 = vmatpush1.msra.mxu0 0.0
  %1958 = vmatprep.subr.mxu0 0.0
  %1959 = vmatpush1.msra.mxu0 0.0
  %1960 = vmatprep.subr.mxu0 0.0
  %1961 = vmatpush1.msra.mxu0 0.0
  %1962 = vmatprep.subr.mxu0 0.0
  %1963 = vmatpush1.msra.mxu0 0.0
  %1964 = vmatprep.subr.mxu0 0.0
  %1965 = vmatpush1.msra.mxu0 0.0
  %1966 = vmatprep.subr.mxu0 0.0
  %1967 = vmatpush1.msra.mxu0 0.0
  %1968 = vmatprep.subr.mxu0 0.0
  %1969 = vmatpush1.msra.mxu0 0.0
  %1970 = vmatprep.subr.mxu0 0.0
  %1971 = vmatpush1.msra.mxu0 0.0
  %1972 = vmatprep.subr.mxu0 0.0
  %1973 = vmatpush1.msra.mxu0 0.0
  %1974 = vmatprep.subr.mxu0 0.0
  %1975 = vmatpush1.msra.mxu0 0.0
  %1976 = vmatprep.subr.mxu0 0.0
  %1977 = vmatpush1.msra.mxu0 0.0
  %1978 = vmatprep.subr.mxu0 0.0
  %1979 = vmatpush1.msra.mxu0 0.0
  %1980 = vmatprep.subr.mxu0 0.0
  %1981 = vmatpush1.msra.mxu0 0.0
  %1982 = vmatprep.subr.mxu0 0.0
  %1983 = vmatpush1.msra.mxu0 0.0
  %1984 = vmatprep.subr.mxu0 0.0
  %1985 = vmatpush1.msra.mxu0 0.0
  %1986 = vmatprep.subr.mxu0 0.0
  %1987 = vmatpush1.msra.mxu0 0.0
  %1988 = vmatprep.subr.mxu0 0.0
  %1989 = vmatpush1.msra.mxu0 0.0
  %1990 = vmatprep.subr.mxu0 0.0
  %1991 = vmatpush1.msra.mxu0 0.0
  %1992 = vmatprep.subr.mxu0 0.0
  %1993 = vmatpush1.msra.mxu0 0.0
  %1994 = vmatprep.subr.mxu0 0.0
  %1995 = vmatpush1.msra.mxu0 0.0
  %1996 = vmatprep.subr.mxu0 0.0
  %1997 = vmatpush1.msra.mxu0 0.0
  %1998 = vmatprep.subr.mxu0 0.0
  %1999 = vmatpush1.msra.mxu0 0.0
  %2000 = vmatprep.subr.mxu0 0.0
  %2001 = vmatpush1.msra.mxu0 0.0
  %2002 = vmatprep.subr.mxu0 0.0
  %2003 = vmatpush1.msra.mxu0 0.0
  %2004 = vmatprep.subr.mxu0 0.0
  %2005 = vmatpush1.msra.mxu0 0.0
  %2006 = vmatprep.subr.mxu0 0.0
  %2007 = vmatpush1.msra.mxu0 0.0
  %2008 = vmatprep.subr.mxu0 0.0
  %2009 = vmatpush1.msra.mxu0 0.0
  %2010 = vmatprep.mubr.f32.mxu0 0.0
  %2011 = vmatmul.mubr.f32.gmra.mrb[0].mxu0 %v1944
  %v2012 = vpop.f32.mrb[0].mxu0
  %v2013 = vadd.f32 %v1937, %v2012
  %v2014 = vpop.f32.mrb[0].mxu0
  %2015 = vdwg.mxu0
  %s2016 = scalar_lea.vmem %s7, 32
  %v2017 = vld [vmem:[%s2016] sm:$0xff]
  %v2018 = vld [vmem:[%s2016 + $0x8] sm:$0xff]
  %v2021 = vrot.slane %v1857, 7
  %v2022 = vsel %vm1866, %v2021, %v1856
  %v2023 = vsel %vm189, %v2022, 0
  %2025 = vmatprep.subr.mxu0 0.0
  %2026 = vmatpush1.msra.mxu0 %v2017
  %2027 = vmatprep.subr.mxu0 0.0
  %2028 = vmatpush1.msra.mxu0 %v2018
  %2029 = vmatprep.subr.mxu0 0.0
  %2030 = vmatpush1.msra.mxu0 0.0
  %2031 = vmatprep.subr.mxu0 0.0
  %2032 = vmatpush1.msra.mxu0 0.0
  %2033 = vmatprep.subr.mxu0 0.0
  %2034 = vmatpush1.msra.mxu0 0.0
  %2035 = vmatprep.subr.mxu0 0.0
  %2036 = vmatpush1.msra.mxu0 0.0
  %2037 = vmatprep.subr.mxu0 0.0
  %2038 = vmatpush1.msra.mxu0 0.0
  %2039 = vmatprep.subr.mxu0 0.0
  %2040 = vmatpush1.msra.mxu0 0.0
  %2041 = vmatprep.subr.mxu0 0.0
  %2042 = vmatpush1.msra.mxu0 0.0
  %2043 = vmatprep.subr.mxu0 0.0
  %2044 = vmatpush1.msra.mxu0 0.0
  %2045 = vmatprep.subr.mxu0 0.0
  %2046 = vmatpush1.msra.mxu0 0.0
  %2047 = vmatprep.subr.mxu0 0.0
  %2048 = vmatpush1.msra.mxu0 0.0
  %2049 = vmatprep.subr.mxu0 0.0
  %2050 = vmatpush1.msra.mxu0 0.0
  %2051 = vmatprep.subr.mxu0 0.0
  %2052 = vmatpush1.msra.mxu0 0.0
  %2053 = vmatprep.subr.mxu0 0.0
  %2054 = vmatpush1.msra.mxu0 0.0
  %2055 = vmatprep.subr.mxu0 0.0
  %2056 = vmatpush1.msra.mxu0 0.0
  %2057 = vmatprep.subr.mxu0 0.0
  %2058 = vmatpush1.msra.mxu0 0.0
  %2059 = vmatprep.subr.mxu0 0.0
  %2060 = vmatpush1.msra.mxu0 0.0
  %2061 = vmatprep.subr.mxu0 0.0
  %2062 = vmatpush1.msra.mxu0 0.0
  %2063 = vmatprep.subr.mxu0 0.0
  %2064 = vmatpush1.msra.mxu0 0.0
  %2065 = vmatprep.subr.mxu0 0.0
  %2066 = vmatpush1.msra.mxu0 0.0
  %2067 = vmatprep.subr.mxu0 0.0
  %2068 = vmatpush1.msra.mxu0 0.0
  %2069 = vmatprep.subr.mxu0 0.0
  %2070 = vmatpush1.msra.mxu0 0.0
  %2071 = vmatprep.subr.mxu0 0.0
  %2072 = vmatpush1.msra.mxu0 0.0
  %2073 = vmatprep.subr.mxu0 0.0
  %2074 = vmatpush1.msra.mxu0 0.0
  %2075 = vmatprep.subr.mxu0 0.0
  %2076 = vmatpush1.msra.mxu0 0.0
  %2077 = vmatprep.subr.mxu0 0.0
  %2078 = vmatpush1.msra.mxu0 0.0
  %2079 = vmatprep.subr.mxu0 0.0
  %2080 = vmatpush1.msra.mxu0 0.0
  %2081 = vmatprep.subr.mxu0 0.0
  %2082 = vmatpush1.msra.mxu0 0.0
  %2083 = vmatprep.subr.mxu0 0.0
  %2084 = vmatpush1.msra.mxu0 0.0
  %2085 = vmatprep.subr.mxu0 0.0
  %2086 = vmatpush1.msra.mxu0 0.0
  %2087 = vmatprep.subr.mxu0 0.0
  %2088 = vmatpush1.msra.mxu0 0.0
  %2089 = vmatprep.mubr.f32.mxu0 0.0
  %2090 = vmatmul.mubr.f32.gmra.mrb[0].mxu0 %v2023
  %v2091 = vpop.f32.mrb[0].mxu0
  %v2092 = vadd.f32 0.0, %v2091
  %v2093 = vpop.f32.mrb[0].mxu0
  %2094 = vdwg.mxu0
  %v2095 = vadd.f32 %v2013, %v2092
  %v2096 = vld [vmem:[%s6 + $0x6] sm:$0x1]
  %v2097 = vlaneseq
  %v2098 = vshrl.u32 %v2097, 7
  %v2099 = vsub.s32 0, %v2098
  %v2100 = vrot.slane %v2096, %v2099
  %v2101 = vadd.f32 %v2095, %v2100
  %v2102 = vmax.f32 %v2101, 0.0
  %v2103 = vmin.f32 %v2101, 0.0
  %v2104 = vmul.f32 %v2103, 1.442695
  %v2105 = vpow.pop %v2104
  %v2106 = vadd.f32 %v2102, %v2105
  %v2107 = vsub.f32 %v2106, 1.0
  %v2108 = vld [vmem:[%s8] sm:$0xff]
  %v2109 = vld [vmem:[%s8 + $0x8] sm:$0xff]
  %v2110 = vld [vmem:[%s8 + $0x10] sm:$0xff]
  %v2111 = vld [vmem:[%s8 + $0x18] sm:$0xff]
  %v2112 = vld [vmem:[%s8 + $0x20] sm:$0xff]
  %v2113 = vld [vmem:[%s8 + $0x28] sm:$0xff]
  %v2114 = vld [vmem:[%s8 + $0x30] sm:$0xff]
  %v2115 = vld [vmem:[%s8 + $0x38] sm:$0xff]
  %v2116 = vld [vmem:[%s8 + $0x40] sm:$0xff]
  %v2117 = vld [vmem:[%s8 + $0x48] sm:$0xff]
  %v2118 = vld [vmem:[%s8 + $0x50] sm:$0xff]
  %v2119 = vld [vmem:[%s8 + $0x58] sm:$0xff]
  %v2120 = vld [vmem:[%s8 + $0x60] sm:$0xff]
  %v2121 = vld [vmem:[%s8 + $0x68] sm:$0xff]
  %v2122 = vld [vmem:[%s8 + $0x70] sm:$0xff]
  %v2123 = vld [vmem:[%s8 + $0x78] sm:$0xff]
  %v2124 = vld [vmem:[%s6 + $0x7] sm:$0x1]
  %v2125 = vlaneseq
  %v2126 = vshrl.u32 %v2125, 7
  %v2127 = vsub.s32 0, %v2126
  %v2128 = vrot.slane %v2124, %v2127
  %2129 = vmatprep.subr.mxu0 0.0
  %2130 = vmatpush1.msra.mxu0 %v2108
  %2131 = vmatprep.subr.mxu0 0.0
  %2132 = vmatpush1.msra.mxu0 %v2109
  %2133 = vmatprep.subr.mxu0 0.0
  %2134 = vmatpush1.msra.mxu0 %v2110
  %2135 = vmatprep.subr.mxu0 0.0
  %2136 = vmatpush1.msra.mxu0 %v2111
  %2137 = vmatprep.subr.mxu0 0.0
  %2138 = vmatpush1.msra.mxu0 %v2112
  %2139 = vmatprep.subr.mxu0 0.0
  %2140 = vmatpush1.msra.mxu0 %v2113
  %2141 = vmatprep.subr.mxu0 0.0
  %2142 = vmatpush1.msra.mxu0 %v2114
  %2143 = vmatprep.subr.mxu0 0.0
  %2144 = vmatpush1.msra.mxu0 %v2115
  %2145 = vmatprep.subr.mxu0 0.0
  %2146 = vmatpush1.msra.mxu0 %v2116
  %2147 = vmatprep.subr.mxu0 0.0
  %2148 = vmatpush1.msra.mxu0 %v2117
  %2149 = vmatprep.subr.mxu0 0.0
  %2150 = vmatpush1.msra.mxu0 %v2118
  %2151 = vmatprep.subr.mxu0 0.0
  %2152 = vmatpush1.msra.mxu0 %v2119
  %2153 = vmatprep.subr.mxu0 0.0
  %2154 = vmatpush1.msra.mxu0 %v2120
  %2155 = vmatprep.subr.mxu0 0.0
  %2156 = vmatpush1.msra.mxu0 %v2121
  %2157 = vmatprep.subr.mxu0 0.0
  %2158 = vmatpush1.msra.mxu0 %v2122
  %2159 = vmatprep.subr.mxu0 0.0
  %2160 = vmatpush1.msra.mxu0 %v2123
  %2161 = vmatprep.subr.mxu0 0.0
  %2162 = vmatpush1.msra.mxu0 0.0
  %2163 = vmatprep.subr.mxu0 0.0
  %2164 = vmatpush1.msra.mxu0 0.0
  %2165 = vmatprep.subr.mxu0 0.0
  %2166 = vmatpush1.msra.mxu0 0.0
  %2167 = vmatprep.subr.mxu0 0.0
  %2168 = vmatpush1.msra.mxu0 0.0
  %2169 = vmatprep.subr.mxu0 0.0
  %2170 = vmatpush1.msra.mxu0 0.0
  %2171 = vmatprep.subr.mxu0 0.0
  %2172 = vmatpush1.msra.mxu0 0.0
  %2173 = vmatprep.subr.mxu0 0.0
  %2174 = vmatpush1.msra.mxu0 0.0
  %2175 = vmatprep.subr.mxu0 0.0
  %2176 = vmatpush1.msra.mxu0 0.0
  %2177 = vmatprep.subr.mxu0 0.0
  %2178 = vmatpush1.msra.mxu0 0.0
  %2179 = vmatprep.subr.mxu0 0.0
  %2180 = vmatpush1.msra.mxu0 0.0
  %2181 = vmatprep.subr.mxu0 0.0
  %2182 = vmatpush1.msra.mxu0 0.0
  %2183 = vmatprep.subr.mxu0 0.0
  %2184 = vmatpush1.msra.mxu0 0.0
  %2185 = vmatprep.subr.mxu0 0.0
  %2186 = vmatpush1.msra.mxu0 0.0
  %2187 = vmatprep.subr.mxu0 0.0
  %2188 = vmatpush1.msra.mxu0 0.0
  %2189 = vmatprep.subr.mxu0 0.0
  %2190 = vmatpush1.msra.mxu0 0.0
  %2191 = vmatprep.subr.mxu0 0.0
  %2192 = vmatpush1.msra.mxu0 0.0
  %2193 = vmatprep.mubr.f32.mxu0 0.0
  %2194 = vmatmul.mubr.f32.gmra.mrb[0].mxu0 %v2107
  %v2195 = vpop.f32.mrb[0].mxu0
  %v2196 = vadd.f32 %v2128, %v2195
  %v2197 = vpop.f32.mrb[0].mxu0
  %2198 = vdwg.mxu0
  %2199 = vst [vmem:[%s9] sm:$0x3] %v2196
  %vm2201 = vcmask 123904
  %2202 = vst.msk [vmem:[%s10] sm:$0x3] %vm2201, %v1943
  %s2204 = scalar_lea.vmem %s10, 2
  %2205 = vst.msk [vmem:[%s2204] sm:$0x3] %vm2201, %v1867
  %s2207 = scalar_lea.vmem %s10, 4
  %2208 = vst.msk [vmem:[%s2207] sm:$0x3] %vm2201, %v2022
  // Predicated region
  $region38: #{cnn_net_forward.1} parent=0 // pred_check
    _
  $region39: #{cnn_net_forward.1} parent=0 // pred_check_branch
    %2210 = sbr.rel (0) target = $region41
  $region40: #{cnn_net_forward.1} parent=0 // pred_region
    _
  $region41: #{cnn_net_forward.1} parent=0 // pred_fallthru
    _
  // Predicated region
  $region42: #{cnn_net_forward.1} parent=0 // pred_check
    _
  $region43: #{cnn_net_forward.1} parent=0 // pred_check_branch
    %2212 = sbr.rel (0) target = $region45
  $region44: #{cnn_net_forward.1} parent=0 // pred_region
    _
  $region45: #{cnn_net_forward.1} parent=0 // pred_fallthru
    _
  // Predicated region
  $region46: #{cnn_net_forward.1} parent=0 // pred_check
    _
  $region47: #{cnn_net_forward.1} parent=0 // pred_check_branch
    %2214 = sbr.rel (0) target = $region49
  $region48: #{cnn_net_forward.1} parent=0 // pred_region
    _
  $region49: #{cnn_net_forward.1} parent=0 // pred_fallthru
    _
  // Predicated region
  $region50: #{cnn_net_forward.1} parent=0 // pred_check
    _
  $region51: #{cnn_net_forward.1} parent=0 // pred_check_branch
    %2216 = sbr.rel (0) target = $region53
  $region52: #{cnn_net_forward.1} parent=0 // pred_region
    _
  $region53: #{cnn_net_forward.1} parent=0 // pred_fallthru
    _

</llo_original>
